<compile_context>
chip_gen: v5e
topology: v5e:2x2
jax: 0.10.0
libtpu: 0.0.40
codegen_flags: <defaults>
</compile_context>

<pallas_src>
import functools

import jax
import jax.numpy as jnp
from jax.experimental import pallas as pl
from jax.experimental.pallas import tpu as pltpu

_SQRT_2_OVER_PI = 0.7978845608028654
_LN_EPS = 1e-5
_NEG_INF = -1e9
_MLP_CHUNK = 2048


def _layernorm(x, g, b):
    mu = jnp.mean(x, axis=-1, keepdims=True)
    var = jnp.mean((x - mu) ** 2, axis=-1, keepdims=True)
    return (x - mu) * jax.lax.rsqrt(var + _LN_EPS) * g + b


def _gelu_new(x):
    # HF GPT2 "gelu_new" (tanh approximation), f32 math.
    return 0.5 * x * (1.0 + jnp.tanh(_SQRT_2_OVER_PI * (x + 0.044715 * x * x * x)))


# ----------------------------------------------------------------------------
# Fused kernel: grid = (batch_blocks, n_layer).  One batch block per parallel
# step; hidden state carried across layers in a VMEM scratch; ln_f + output
# masking fused into the last layer step.
# ----------------------------------------------------------------------------
def set_decoder_block_kernel(x_ref, mask_ref,
                             ln1g_ref, ln1b_ref,
                             wq_ref, bq_ref, wk_ref, bk_ref, wv_ref, bv_ref,
                             wo_ref, bo_ref,
                             ln2g_ref, ln2b_ref,
                             wfc_ref, bfc_ref, wpr_ref, bpr_ref,
                             lnfg_ref, lnfb_ref,
                             hid_ref, ypred_ref,
                             h_scratch, bias_scratch, *, n_head):
    layer = pl.program_id(1)
    n_layers = pl.num_programs(1)

    Bt, S, H = x_ref.shape
    N = Bt * S
    hd = H // n_head
    scale = 1.0 / float(hd) ** 0.5
    bf = jnp.bfloat16
    f32 = jnp.float32

    # Layer 0 (per batch block): seed the resident hidden state and build the
    # layer-invariant additive attention bias once (causal + key padding).
    @pl.when(layer == 0)
    def _():
        h_scratch[...] = x_ref[...].astype(f32)
        qpos = jax.lax.broadcasted_iota(jnp.int32, (S, S), 0)
        kpos = jax.lax.broadcasted_iota(jnp.int32, (S, S), 1)
        causal = (kpos <= qpos)[None, :, :]                  # (1, S, S)
        keymask = mask_ref[...] > 0.5                        # (Bt, 1, S)
        keep = jnp.logical_and(causal, keymask)              # (Bt, S, S)
        bias_scratch[...] = jnp.where(keep, f32(0.0), f32(_NEG_INF))

    x2 = h_scratch[...].reshape(N, H)                        # (N, H) f32
    attn_bias = bias_scratch[...]                            # (Bt, S, S) f32

    # --- attention -----------------------------------------------------------
    h1 = _layernorm(x2, ln1g_ref[0, 0], ln1b_ref[0, 0]).astype(bf)

    # Full-width projections (head-major columns) -> per-head slices are
    # contiguous column blocks.  Scale folded into Q.
    q = jnp.dot(h1, wq_ref[0], preferred_element_type=f32)
    q = ((q + bq_ref[0, 0]) * scale).astype(bf)
    k = (jnp.dot(h1, wk_ref[0], preferred_element_type=f32) + bk_ref[0, 0]).astype(bf)
    v = (jnp.dot(h1, wv_ref[0], preferred_element_type=f32) + bv_ref[0, 0]).astype(bf)

    head_ctx = []
    for h in range(n_head):                                  # static unroll (S x S part is inherently per-head)
        lo = h * hd
        qh = q[:, lo:lo + hd].reshape(Bt, S, hd)
        kh = k[:, lo:lo + hd].reshape(Bt, S, hd)
        vh = v[:, lo:lo + hd].reshape(Bt, S, hd)
        s = jnp.einsum("bqd,bkd->bqk", qh, kh, preferred_element_type=f32)
        s = s + attn_bias
        s = s - jnp.max(s, axis=-1, keepdims=True)
        p = jnp.exp(s)
        p = p / jnp.sum(p, axis=-1, keepdims=True)           # exact divide (parity)
        oh = jnp.einsum("bqk,bkd->bqd", p.astype(bf), vh, preferred_element_type=f32)
        head_ctx.append(oh.astype(bf))

    ctx = jnp.concatenate(head_ctx, axis=-1).reshape(N, H)   # (N, H) bf16, head-major
    x2 = x2 + jnp.dot(ctx, wo_ref[0], preferred_element_type=f32) + bo_ref[0, 0]

    # --- MLP (4H dimension chunked; intermediate never materializes whole) ----
    h2 = _layernorm(x2, ln2g_ref[0, 0], ln2b_ref[0, 0]).astype(bf)
    FF = wfc_ref.shape[-1]
    n_chunks = -(-FF // _MLP_CHUNK)
    if FF % n_chunks != 0:
        n_chunks = 1
    ffc = FF // n_chunks

    mlp = jnp.zeros((N, H), f32)
    for c in range(n_chunks):
        lo = c * ffc
        mc = jnp.dot(h2, wfc_ref[0, :, pl.ds(lo, ffc)], preferred_element_type=f32)
        mc = _gelu_new(mc + bfc_ref[0, 0, pl.ds(lo, ffc)])
        mlp = mlp + jnp.dot(mc.astype(bf), wpr_ref[0, pl.ds(lo, ffc), :],
                            preferred_element_type=f32)

    h_new = x2 + mlp + bpr_ref[0, 0]                         # (N, H) f32
    h_new3 = h_new.reshape(Bt, S, H)

    # Per-layer hidden-state output (HF replaces the last one with ln_f(h)).
    @pl.when(layer < n_layers - 1)
    def _():
        h_scratch[...] = h_new3                              # carry to next layer
        hid_ref[0] = h_new3.astype(hid_ref.dtype)

    @pl.when(layer == n_layers - 1)
    def _():
        y = _layernorm(h_new, lnfg_ref[0], lnfb_ref[0]).reshape(Bt, S, H)
        hid_ref[0] = y.astype(hid_ref.dtype)
        maskq = mask_ref[...].reshape(Bt, S, 1)               # (Bt,1,S) -> (Bt,S,1)
        ypred_ref[...] = (y * maskq).astype(ypred_ref.dtype)


def _pick_vmem_limit_bytes():
    mib = 1024 * 1024
    try:
        cap = int(pltpu.get_tpu_info().vmem_capacity_bytes)
    except Exception:
        cap = 128 * mib
    # ~96 MiB on v5e/v6e (128 MiB physical), ~48 MiB on v7x (64 MiB/core).
    return int(max(32 * mib, min(100 * mib, (cap * 3) // 4)))


def run_set_decoder(x0, mask3, sp, lnf_g, lnf_b, n_head, batch_block=None):
    B, S, H = x0.shape
    L = sp["w_q"].shape[0]

    if batch_block is None:
        batch_block = B // 2 if (B % 2 == 0 and B >= 2) else B
    bt = batch_block
    assert B % bt == 0, "batch must be divisible by the batch block"
    nb = B // bt

    layer_arrays = [sp["ln1_g"], sp["ln1_b"],
                    sp["w_q"], sp["b_q"], sp["w_k"], sp["b_k"],
                    sp["w_v"], sp["b_v"], sp["w_o"], sp["b_o"],
                    sp["ln2_g"], sp["ln2_b"],
                    sp["w_fc"], sp["b_fc"], sp["w_pr"], sp["b_pr"]]
    const_arrays = [lnf_g, lnf_b]
    inputs = [x0, mask3] + layer_arrays + const_arrays

    def const_spec(a):
        nd = a.ndim
        return pl.BlockSpec(a.shape, lambda b, l, _nd=nd: (0,) * _nd)

    def layer_spec(a):
        nd = a.ndim
        return pl.BlockSpec((1,) + a.shape[1:],
                            lambda b, l, _nd=nd: (l,) + (0,) * (_nd - 1))

    in_specs = ([pl.BlockSpec((bt, S, H), lambda b, l: (b, 0, 0)),   # x0 (bf16, layer-0 only)
                 pl.BlockSpec((bt, 1, S), lambda b, l: (b, 0, 0))]   # mask
                + [layer_spec(a) for a in layer_arrays]
                + [const_spec(a) for a in const_arrays])

    out_shape = (jax.ShapeDtypeStruct((L, B, S, H), jnp.bfloat16),   # per-layer hidden (bf16 writeback)
                 jax.ShapeDtypeStruct((B, S, H), jnp.float32))       # y_pred
    out_specs = [pl.BlockSpec((1, bt, S, H), lambda b, l: (l, b, 0, 0)),
                 pl.BlockSpec((bt, S, H), lambda b, l: (b, 0, 0))]   # resident across layers

    hid, ypred = pl.pallas_call(
        functools.partial(set_decoder_block_kernel, n_head=n_head),
        out_shape=out_shape,
        grid_spec=pltpu.PrefetchScalarGridSpec(
            num_scalar_prefetch=0,
            grid=(nb, L),
            in_specs=in_specs,
            out_specs=out_specs,
            scratch_shapes=[pltpu.VMEM((bt, S, H), jnp.float32),     # resident hidden state
                            pltpu.VMEM((bt, S, S), jnp.float32)],    # layer-invariant attn bias
        ),
        compiler_params=pltpu.CompilerParams(
            dimension_semantics=("parallel", "arbitrary"),           # batch over cores; layers carry state
            vmem_limit_bytes=_pick_vmem_limit_bytes(),
        ),
    )(*inputs)
    return hid, ypred


# ----------------------------------------------------------------------------
# Parameter construction (deterministic synthetic weights) + stacking.
# ----------------------------------------------------------------------------
def init_params(key, n_layer, S, H):
    std = 0.02
    params = {"layers": []}
    key, k_wpe = jax.random.split(key)
    params["wpe"] = std * jax.random.normal(k_wpe, (S, H), jnp.float32)
    for _ in range(n_layer):
        key, kq, kk, kv, ko, kf, kp2 = jax.random.split(key, 7)
        lp = {
            "ln1_g": jnp.ones((1, H), jnp.float32),
            "ln1_b": jnp.zeros((1, H), jnp.float32),
            "w_q": std * jax.random.normal(kq, (H, H), jnp.float32),
            "b_q": jnp.zeros((1, H), jnp.float32),
            "w_k": std * jax.random.normal(kk, (H, H), jnp.float32),
            "b_k": jnp.zeros((1, H), jnp.float32),
            "w_v": std * jax.random.normal(kv, (H, H), jnp.float32),
            "b_v": jnp.zeros((1, H), jnp.float32),
            "w_attn_proj": std * jax.random.normal(ko, (H, H), jnp.float32),
            "b_attn_proj": jnp.zeros((1, H), jnp.float32),
            "ln2_g": jnp.ones((1, H), jnp.float32),
            "ln2_b": jnp.zeros((1, H), jnp.float32),
            "w_fc": std * jax.random.normal(kf, (H, 4 * H), jnp.float32),
            "b_fc": jnp.zeros((1, 4 * H), jnp.float32),
            "w_mlp_proj": std * jax.random.normal(kp2, (4 * H, H), jnp.float32),
            "b_mlp_proj": jnp.zeros((1, H), jnp.float32),
        }
        params["layers"].append(lp)
    params["lnf_g"] = jnp.ones((1, H), jnp.float32)
    params["lnf_b"] = jnp.zeros((1, H), jnp.float32)
    return params


def _stack_params(params):
    """Stack per-layer weights along a leading layer axis.  Matmul weights are
    bf16 (MXU-native, f32 accumulation in-kernel); LN params / biases stay f32.
    Q/K/V/out-proj are kept full-width (no per-head splitting)."""
    bf = jnp.bfloat16

    def stack(name):
        return jnp.stack([lp[name] for lp in params["layers"]], axis=0)

    return {
        "ln1_g": stack("ln1_g"), "ln1_b": stack("ln1_b"),
        "w_q": stack("w_q").astype(bf), "b_q": stack("b_q"),
        "w_k": stack("w_k").astype(bf), "b_k": stack("b_k"),
        "w_v": stack("w_v").astype(bf), "b_v": stack("b_v"),
        "w_o": stack("w_attn_proj").astype(bf), "b_o": stack("b_attn_proj"),
        "ln2_g": stack("ln2_g"), "ln2_b": stack("ln2_b"),
        "w_fc": stack("w_fc").astype(bf), "b_fc": stack("b_fc"),
        "w_pr": stack("w_mlp_proj").astype(bf), "b_pr": stack("b_mlp_proj"),
    }


# ----------------------------------------------------------------------------
# Full forward: mirrors SetDecoder.forward (y_pred, concatenated hidden, MSE loss).
# ----------------------------------------------------------------------------
def set_decoder_forward(params, x_set, mask, y_set, n_head):
    B, S, H = x_set.shape
    L = len(params["layers"])

    # positional embeddings (inputs_embeds path); dropout is identity in eval
    x0 = (x_set + params["wpe"][None, :, :]).astype(jnp.bfloat16)
    mask3 = mask.astype(jnp.float32).reshape(B, 1, S)
    stacked = _stack_params(params)

    hid_layers, y_pred = run_set_decoder(x0, mask3, stacked,
                                         params["lnf_g"], params["lnf_b"], n_head)

    # hidden_states[1:] concatenated along the sequence dim (last one is ln_f'd)
    hidden = jnp.transpose(hid_layers, (1, 0, 2, 3)).reshape(B, L * S, H).astype(jnp.float32)

    # per-position MSE losses, then mean (matches the Python loop + stack + mean)
    losses = jnp.mean((y_pred - y_set) ** 2, axis=(0, 2))   # (S,)
    loss = jnp.mean(losses)
    return {"y_pred": y_pred, "hidden": hidden, "loss": loss}


if __name__ == "__main__":
    B, S, H = 2, 8, 32
    n_head, n_layer = 4, 2

    key = jax.random.PRNGKey(0)
    key, kx, ky, kp = jax.random.split(key, 4)
    x_set = jax.random.normal(kx, (B, S, H), jnp.float32)
    y_set = jax.random.normal(ky, (B, S, H), jnp.float32)
    # padded set mask: first sequence full, second has 6 valid elements
    lengths = jnp.array([[S], [6]])
    mask = (jnp.arange(S)[None, :] < lengths).astype(jnp.float32)   # (B, S)

    params = init_params(kp, n_layer, S, H)

    out = set_decoder_forward(params, x_set, mask, y_set, n_head)
    jax.block_until_ready(out)

    assert out["y_pred"].shape == (B, S, H)
    assert out["hidden"].shape == (B, n_layer * S, H)
    assert out["loss"].shape == ()
    assert bool(jnp.isfinite(out["loss"]))
    print("KERNEL_OK")
</pallas_src>

<mosaic_0001>
module attributes {stable_mosaic.version = 11 : i64} {
  func.func @set_decoder_block_kernel(%arg0: i32, %arg1: i32, %arg2: memref<1x8x32xbf16, #tpu.memory_space<vmem>>, %arg3: memref<1x1x8xf32, #tpu.memory_space<vmem>>, %arg4: memref<1x1x32xf32, #tpu.memory_space<vmem>>, %arg5: memref<1x1x32xf32, #tpu.memory_space<vmem>>, %arg6: memref<1x32x32xbf16, #tpu.memory_space<vmem>>, %arg7: memref<1x1x32xf32, #tpu.memory_space<vmem>>, %arg8: memref<1x32x32xbf16, #tpu.memory_space<vmem>>, %arg9: memref<1x1x32xf32, #tpu.memory_space<vmem>>, %arg10: memref<1x32x32xbf16, #tpu.memory_space<vmem>>, %arg11: memref<1x1x32xf32, #tpu.memory_space<vmem>>, %arg12: memref<1x32x32xbf16, #tpu.memory_space<vmem>>, %arg13: memref<1x1x32xf32, #tpu.memory_space<vmem>>, %arg14: memref<1x1x32xf32, #tpu.memory_space<vmem>>, %arg15: memref<1x1x32xf32, #tpu.memory_space<vmem>>, %arg16: memref<1x32x128xbf16, #tpu.memory_space<vmem>>, %arg17: memref<1x1x128xf32, #tpu.memory_space<vmem>>, %arg18: memref<1x128x32xbf16, #tpu.memory_space<vmem>>, %arg19: memref<1x1x32xf32, #tpu.memory_space<vmem>>, %arg20: memref<1x32xf32, #tpu.memory_space<vmem>>, %arg21: memref<1x32xf32, #tpu.memory_space<vmem>>, %arg22: memref<1x1x8x32xbf16, #tpu.memory_space<vmem>>, %arg23: memref<1x8x32xf32, #tpu.memory_space<vmem>>, %arg24: memref<1x8x32xf32, #tpu.memory_space<vmem>>, %arg25: memref<1x8x8xf32, #tpu.memory_space<vmem>>) attributes {dimension_semantics = [#tpu.dimension_semantics<parallel>, #tpu.dimension_semantics<arbitrary>], iteration_bounds = array<i64: 2, 2>, scalar_prefetch = 0 : i64, scratch_operands = 2 : i64, tpu.core_type = #tpu.core_type<tc>, window_params = [{transform_indices = @transform_0, window_bounds = array<i64: 1, 8, 32>}, {transform_indices = @transform_1, window_bounds = array<i64: 1, 1, 8>}, {transform_indices = @transform_2, window_bounds = array<i64: 1, 1, 32>}, {transform_indices = @transform_3, window_bounds = array<i64: 1, 1, 32>}, {transform_indices = @transform_4, window_bounds = array<i64: 1, 32, 32>}, {transform_indices = @transform_5, window_bounds = array<i64: 1, 1, 32>}, {transform_indices = @transform_6, window_bounds = array<i64: 1, 32, 32>}, {transform_indices = @transform_7, window_bounds = array<i64: 1, 1, 32>}, {transform_indices = @transform_8, window_bounds = array<i64: 1, 32, 32>}, {transform_indices = @transform_9, window_bounds = array<i64: 1, 1, 32>}, {transform_indices = @transform_10, window_bounds = array<i64: 1, 32, 32>}, {transform_indices = @transform_11, window_bounds = array<i64: 1, 1, 32>}, {transform_indices = @transform_12, window_bounds = array<i64: 1, 1, 32>}, {transform_indices = @transform_13, window_bounds = array<i64: 1, 1, 32>}, {transform_indices = @transform_14, window_bounds = array<i64: 1, 32, 128>}, {transform_indices = @transform_15, window_bounds = array<i64: 1, 1, 128>}, {transform_indices = @transform_16, window_bounds = array<i64: 1, 128, 32>}, {transform_indices = @transform_17, window_bounds = array<i64: 1, 1, 32>}, {pipeline_mode = #tpu.pipeline_mode<synchronous>, transform_indices = @transform_18, window_bounds = array<i64: 1, 32>}, {pipeline_mode = #tpu.pipeline_mode<synchronous>, transform_indices = @transform_19, window_bounds = array<i64: 1, 32>}, {transform_indices = @transform_20, window_bounds = array<i64: 1, 1, 8, 32>}, {transform_indices = @transform_21, window_bounds = array<i64: 1, 8, 32>}]} {
    %c0_i32 = arith.constant 0 : i32
    %0 = arith.cmpi eq, %arg1, %c0_i32 : i32
    %1 = arith.extui %0 : i1 to i32
    %c0_i32_0 = arith.constant 0 : i32
    %2 = arith.cmpi ne, %1, %c0_i32_0 : i32
    scf.if %2 {
      %c0_94 = arith.constant 0 : index
      %c0_95 = arith.constant 0 : index
      %c0_96 = arith.constant 0 : index
      %224 = vector.load %arg2[%c0_94, %c0_95, %c0_96] : memref<1x8x32xbf16, #tpu.memory_space<vmem>>, vector<1x8x32xbf16>
      %225 = arith.extf %224 : vector<1x8x32xbf16> to vector<1x8x32xf32>
      %c0_97 = arith.constant 0 : index
      %c0_98 = arith.constant 0 : index
      %c0_99 = arith.constant 0 : index
      %226 = vector.load %arg24[%c0_97, %c0_98, %c0_99] : memref<1x8x32xf32, #tpu.memory_space<vmem>>, vector<1x8x32xf32>
      tpu.vector_store %arg24[%c0_97, %c0_98, %c0_99], %225 {strides = array<i32>} : memref<1x8x32xf32, #tpu.memory_space<vmem>>, vector<1x8x32xf32>,
      %227 = tpu.iota {dimensions = array<i32: 0>} : vector<8x8xi32>
      %228 = tpu.iota {dimensions = array<i32: 1>} : vector<8x8xi32>
      %229 = arith.cmpi sle, %228, %227 : vector<8x8xi32>
      %230 = vector.shape_cast %229 : vector<8x8xi1> to vector<1x8x8xi1>
      %c0_100 = arith.constant 0 : index
      %c0_101 = arith.constant 0 : index
      %c0_102 = arith.constant 0 : index
      %231 = vector.load %arg3[%c0_100, %c0_101, %c0_102] : memref<1x1x8xf32, #tpu.memory_space<vmem>>, vector<1x1x8xf32>
      %cst_103 = arith.constant 5.000000e-01 : f32
      %232 = vector.broadcast %cst_103 : f32 to vector<1x1x8xf32>
      %233 = arith.cmpf ogt, %231, %232 : vector<1x1x8xf32>
      %234 = vector.broadcast %233 : vector<1x1x8xi1> to vector<1x8x8xi1>
      %235 = arith.andi %230, %234 : vector<1x8x8xi1>
      %cst_104 = arith.constant 0.000000e+00 : f32
      %cst_105 = arith.constant -1.000000e+09 : f32
      %236 = vector.broadcast %cst_104 : f32 to vector<1x8x8xf32>
      %237 = vector.broadcast %cst_105 : f32 to vector<1x8x8xf32>
      %238 = arith.select %235, %236, %237 : vector<1x8x8xi1>, vector<1x8x8xf32>
      %c0_106 = arith.constant 0 : index
      %c0_107 = arith.constant 0 : index
      %c0_108 = arith.constant 0 : index
      %239 = vector.load %arg25[%c0_106, %c0_107, %c0_108] : memref<1x8x8xf32, #tpu.memory_space<vmem>>, vector<1x8x8xf32>
      tpu.vector_store %arg25[%c0_106, %c0_107, %c0_108], %238 {strides = array<i32>} : memref<1x8x8xf32, #tpu.memory_space<vmem>>, vector<1x8x8xf32>,
    } else {
    }
    %c0 = arith.constant 0 : index
    %c0_1 = arith.constant 0 : index
    %c0_2 = arith.constant 0 : index
    %3 = vector.load %arg24[%c0, %c0_1, %c0_2] : memref<1x8x32xf32, #tpu.memory_space<vmem>>, vector<1x8x32xf32>
    %4 = vector.shape_cast %3 : vector<1x8x32xf32> to vector<8x32xf32>
    %c0_3 = arith.constant 0 : index
    %c0_4 = arith.constant 0 : index
    %c0_5 = arith.constant 0 : index
    %5 = vector.load %arg25[%c0_3, %c0_4, %c0_5] : memref<1x8x8xf32, #tpu.memory_space<vmem>>, vector<1x8x8xf32>
    %c0_6 = arith.constant 0 : index
    %c0_7 = arith.constant 0 : index
    %c0_8 = arith.constant 0 : index
    %6 = vector.load %arg4[%c0_6, %c0_7, %c0_8] : memref<1x1x32xf32, #tpu.memory_space<vmem>>, vector<1x1x32xf32>
    %7 = vector.shape_cast %6 : vector<1x1x32xf32> to vector<32xf32>
    %c0_9 = arith.constant 0 : index
    %c0_10 = arith.constant 0 : index
    %c0_11 = arith.constant 0 : index
    %8 = vector.load %arg5[%c0_9, %c0_10, %c0_11] : memref<1x1x32xf32, #tpu.memory_space<vmem>>, vector<1x1x32xf32>
    %9 = vector.shape_cast %8 : vector<1x1x32xf32> to vector<32xf32>
    %cst = arith.constant dense<0.000000e+00> : vector<8xf32>
    %10 = vector.multi_reduction <add>, %4, %cst [1] : vector<8x32xf32> to vector<8xf32>
    %11 = vector.shape_cast %10 : vector<8xf32> to vector<8x1xf32>
    %cst_12 = arith.constant 3.200000e+01 : f32
    %12 = vector.broadcast %cst_12 : f32 to vector<8x1xf32>
    %13 = arith.divf %11, %12 : vector<8x1xf32>
    %14 = vector.broadcast %13 : vector<8x1xf32> to vector<8x32xf32>
    %15 = arith.subf %4, %14 : vector<8x32xf32>
    %16 = arith.mulf %15, %15 : vector<8x32xf32>
    %cst_13 = arith.constant dense<0.000000e+00> : vector<8xf32>
    %17 = vector.multi_reduction <add>, %16, %cst_13 [1] : vector<8x32xf32> to vector<8xf32>
    %18 = vector.shape_cast %17 : vector<8xf32> to vector<8x1xf32>
    %cst_14 = arith.constant 3.200000e+01 : f32
    %19 = vector.broadcast %cst_14 : f32 to vector<8x1xf32>
    %20 = arith.divf %18, %19 : vector<8x1xf32>
    %21 = vector.broadcast %13 : vector<8x1xf32> to vector<8x32xf32>
    %22 = arith.subf %4, %21 : vector<8x32xf32>
    %cst_15 = arith.constant 9.99999974E-6 : f32
    %23 = vector.broadcast %cst_15 : f32 to vector<8x1xf32>
    %24 = arith.addf %20, %23 : vector<8x1xf32>
    %25 = math.rsqrt %24 : vector<8x1xf32>
    %26 = vector.broadcast %25 : vector<8x1xf32> to vector<8x32xf32>
    %27 = arith.mulf %22, %26 : vector<8x32xf32>
    %28 = vector.shape_cast %7 : vector<32xf32> to vector<1x32xf32>
    %29 = vector.broadcast %28 : vector<1x32xf32> to vector<8x32xf32>
    %30 = arith.mulf %27, %29 : vector<8x32xf32>
    %31 = vector.shape_cast %9 : vector<32xf32> to vector<1x32xf32>
    %32 = vector.broadcast %31 : vector<1x32xf32> to vector<8x32xf32>
    %33 = arith.addf %30, %32 : vector<8x32xf32>
    %34 = arith.truncf %33 : vector<8x32xf32> to vector<8x32xbf16>
    %c0_16 = arith.constant 0 : index
    %c0_17 = arith.constant 0 : index
    %c0_18 = arith.constant 0 : index
    %35 = vector.load %arg6[%c0_16, %c0_17, %c0_18] : memref<1x32x32xbf16, #tpu.memory_space<vmem>>, vector<1x32x32xbf16>
    %36 = vector.shape_cast %35 : vector<1x32x32xbf16> to vector<32x32xbf16>
    %cst_19 = arith.constant dense<0.000000e+00> : vector<8x32xf32>
    %37 = tpu.matmul %34, %36, %cst_19 {dimension_numbers = #tpu.dot_dimension_numbers<[1], [0], [0], [1], [0, 0, 1, 1], [], []>} : vector<8x32xbf16>, vector<32x32xbf16>, vector<8x32xf32> -> vector<8x32xf32>
    %c0_20 = arith.constant 0 : index
    %c0_21 = arith.constant 0 : index
    %c0_22 = arith.constant 0 : index
    %38 = vector.load %arg7[%c0_20, %c0_21, %c0_22] : memref<1x1x32xf32, #tpu.memory_space<vmem>>, vector<1x1x32xf32>
    %39 = vector.shape_cast %38 : vector<1x1x32xf32> to vector<32xf32>
    %40 = vector.shape_cast %39 : vector<32xf32> to vector<1x32xf32>
    %41 = vector.broadcast %40 : vector<1x32xf32> to vector<8x32xf32>
    %42 = arith.addf %37, %41 : vector<8x32xf32>
    %cst_23 = arith.constant 0.353553385 : f32
    %43 = vector.broadcast %cst_23 : f32 to vector<8x32xf32>
    %44 = arith.mulf %42, %43 : vector<8x32xf32>
    %45 = arith.truncf %44 : vector<8x32xf32> to vector<8x32xbf16>
    %c0_24 = arith.constant 0 : index
    %c0_25 = arith.constant 0 : index
    %c0_26 = arith.constant 0 : index
    %46 = vector.load %arg8[%c0_24, %c0_25, %c0_26] : memref<1x32x32xbf16, #tpu.memory_space<vmem>>, vector<1x32x32xbf16>
    %47 = vector.shape_cast %46 : vector<1x32x32xbf16> to vector<32x32xbf16>
    %cst_27 = arith.constant dense<0.000000e+00> : vector<8x32xf32>
    %48 = tpu.matmul %34, %47, %cst_27 {dimension_numbers = #tpu.dot_dimension_numbers<[1], [0], [0], [1], [0, 0, 1, 1], [], []>} : vector<8x32xbf16>, vector<32x32xbf16>, vector<8x32xf32> -> vector<8x32xf32>
    %c0_28 = arith.constant 0 : index
    %c0_29 = arith.constant 0 : index
    %c0_30 = arith.constant 0 : index
    %49 = vector.load %arg9[%c0_28, %c0_29, %c0_30] : memref<1x1x32xf32, #tpu.memory_space<vmem>>, vector<1x1x32xf32>
    %50 = vector.shape_cast %49 : vector<1x1x32xf32> to vector<32xf32>
    %51 = vector.shape_cast %50 : vector<32xf32> to vector<1x32xf32>
    %52 = vector.broadcast %51 : vector<1x32xf32> to vector<8x32xf32>
    %53 = arith.addf %48, %52 : vector<8x32xf32>
    %54 = arith.truncf %53 : vector<8x32xf32> to vector<8x32xbf16>
    %c0_31 = arith.constant 0 : index
    %c0_32 = arith.constant 0 : index
    %c0_33 = arith.constant 0 : index
    %55 = vector.load %arg10[%c0_31, %c0_32, %c0_33] : memref<1x32x32xbf16, #tpu.memory_space<vmem>>, vector<1x32x32xbf16>
    %56 = vector.shape_cast %55 : vector<1x32x32xbf16> to vector<32x32xbf16>
    %cst_34 = arith.constant dense<0.000000e+00> : vector<8x32xf32>
    %57 = tpu.matmul %34, %56, %cst_34 {dimension_numbers = #tpu.dot_dimension_numbers<[1], [0], [0], [1], [0, 0, 1, 1], [], []>} : vector<8x32xbf16>, vector<32x32xbf16>, vector<8x32xf32> -> vector<8x32xf32>
    %c0_35 = arith.constant 0 : index
    %c0_36 = arith.constant 0 : index
    %c0_37 = arith.constant 0 : index
    %58 = vector.load %arg11[%c0_35, %c0_36, %c0_37] : memref<1x1x32xf32, #tpu.memory_space<vmem>>, vector<1x1x32xf32>
    %59 = vector.shape_cast %58 : vector<1x1x32xf32> to vector<32xf32>
    %60 = vector.shape_cast %59 : vector<32xf32> to vector<1x32xf32>
    %61 = vector.broadcast %60 : vector<1x32xf32> to vector<8x32xf32>
    %62 = arith.addf %57, %61 : vector<8x32xf32>
    %63 = arith.truncf %62 : vector<8x32xf32> to vector<8x32xbf16>
    %64 = vector.extract_strided_slice %45 {offsets = [0, 0], sizes = [8, 8], strides = [1, 1]} : vector<8x32xbf16> to vector<8x8xbf16>
    %65 = vector.shape_cast %64 : vector<8x8xbf16> to vector<1x8x8xbf16>
    %66 = vector.extract_strided_slice %54 {offsets = [0, 0], sizes = [8, 8], strides = [1, 1]} : vector<8x32xbf16> to vector<8x8xbf16>
    %67 = vector.shape_cast %66 : vector<8x8xbf16> to vector<1x8x8xbf16>
    %68 = vector.extract_strided_slice %63 {offsets = [0, 0], sizes = [8, 8], strides = [1, 1]} : vector<8x32xbf16> to vector<8x8xbf16>
    %69 = vector.shape_cast %68 : vector<8x8xbf16> to vector<1x8x8xbf16>
    "tpu.trace_start"() <{level = 10 : i32, message = "bqd,bkd->bqk"}> : () -> ()
    %cst_38 = arith.constant dense<0.000000e+00> : vector<1x8x8xf32>
    %70 = tpu.matmul %65, %67, %cst_38 {dimension_numbers = #tpu.dot_dimension_numbers<[2], [2], [1], [1], [0, 0, 0, 1, 1, 1], [0], [0]>} : vector<1x8x8xbf16>, vector<1x8x8xbf16>, vector<1x8x8xf32> -> vector<1x8x8xf32>
    "tpu.trace_stop"() : () -> ()
    %71 = arith.addf %70, %5 : vector<1x8x8xf32>
    %cst_39 = arith.constant dense<0xFF800000> : vector<1x8xf32>
    %72 = vector.multi_reduction <maximumf>, %71, %cst_39 [2] : vector<1x8x8xf32> to vector<1x8xf32>
    %73 = vector.shape_cast %72 : vector<1x8xf32> to vector<1x8x1xf32>
    %74 = vector.broadcast %73 : vector<1x8x1xf32> to vector<1x8x8xf32>
    %75 = arith.subf %71, %74 : vector<1x8x8xf32>
    %76 = math.exp %75 : vector<1x8x8xf32>
    %cst_40 = arith.constant dense<0.000000e+00> : vector<1x8xf32>
    %77 = vector.multi_reduction <add>, %76, %cst_40 [2] : vector<1x8x8xf32> to vector<1x8xf32>
    %78 = vector.shape_cast %77 : vector<1x8xf32> to vector<1x8x1xf32>
    %79 = vector.broadcast %78 : vector<1x8x1xf32> to vector<1x8x8xf32>
    %80 = arith.divf %76, %79 : vector<1x8x8xf32>
    %81 = arith.truncf %80 : vector<1x8x8xf32> to vector<1x8x8xbf16>
    "tpu.trace_start"() <{level = 10 : i32, message = "bqk,bkd->bqd"}> : () -> ()
    %cst_41 = arith.constant dense<0.000000e+00> : vector<1x8x8xf32>
    %82 = tpu.matmul %81, %69, %cst_41 {dimension_numbers = #tpu.dot_dimension_numbers<[2], [1], [1], [2], [0, 0, 0, 1, 1, 2], [0], [0]>} : vector<1x8x8xbf16>, vector<1x8x8xbf16>, vector<1x8x8xf32> -> vector<1x8x8xf32>
    "tpu.trace_stop"() : () -> ()
    %83 = arith.truncf %82 : vector<1x8x8xf32> to vector<1x8x8xbf16>
    %84 = vector.extract_strided_slice %45 {offsets = [0, 8], sizes = [8, 8], strides = [1, 1]} : vector<8x32xbf16> to vector<8x8xbf16>
    %85 = vector.shape_cast %84 : vector<8x8xbf16> to vector<1x8x8xbf16>
    %86 = vector.extract_strided_slice %54 {offsets = [0, 8], sizes = [8, 8], strides = [1, 1]} : vector<8x32xbf16> to vector<8x8xbf16>
    %87 = vector.shape_cast %86 : vector<8x8xbf16> to vector<1x8x8xbf16>
    %88 = vector.extract_strided_slice %63 {offsets = [0, 8], sizes = [8, 8], strides = [1, 1]} : vector<8x32xbf16> to vector<8x8xbf16>
    %89 = vector.shape_cast %88 : vector<8x8xbf16> to vector<1x8x8xbf16>
    "tpu.trace_start"() <{level = 10 : i32, message = "bqd,bkd->bqk"}> : () -> ()
    %cst_42 = arith.constant dense<0.000000e+00> : vector<1x8x8xf32>
    %90 = tpu.matmul %85, %87, %cst_42 {dimension_numbers = #tpu.dot_dimension_numbers<[2], [2], [1], [1], [0, 0, 0, 1, 1, 1], [0], [0]>} : vector<1x8x8xbf16>, vector<1x8x8xbf16>, vector<1x8x8xf32> -> vector<1x8x8xf32>
    "tpu.trace_stop"() : () -> ()
    %91 = arith.addf %90, %5 : vector<1x8x8xf32>
    %cst_43 = arith.constant dense<0xFF800000> : vector<1x8xf32>
    %92 = vector.multi_reduction <maximumf>, %91, %cst_43 [2] : vector<1x8x8xf32> to vector<1x8xf32>
    %93 = vector.shape_cast %92 : vector<1x8xf32> to vector<1x8x1xf32>
    %94 = vector.broadcast %93 : vector<1x8x1xf32> to vector<1x8x8xf32>
    %95 = arith.subf %91, %94 : vector<1x8x8xf32>
    %96 = math.exp %95 : vector<1x8x8xf32>
    %cst_44 = arith.constant dense<0.000000e+00> : vector<1x8xf32>
    %97 = vector.multi_reduction <add>, %96, %cst_44 [2] : vector<1x8x8xf32> to vector<1x8xf32>
    %98 = vector.shape_cast %97 : vector<1x8xf32> to vector<1x8x1xf32>
    %99 = vector.broadcast %98 : vector<1x8x1xf32> to vector<1x8x8xf32>
    %100 = arith.divf %96, %99 : vector<1x8x8xf32>
    %101 = arith.truncf %100 : vector<1x8x8xf32> to vector<1x8x8xbf16>
    "tpu.trace_start"() <{level = 10 : i32, message = "bqk,bkd->bqd"}> : () -> ()
    %cst_45 = arith.constant dense<0.000000e+00> : vector<1x8x8xf32>
    %102 = tpu.matmul %101, %89, %cst_45 {dimension_numbers = #tpu.dot_dimension_numbers<[2], [1], [1], [2], [0, 0, 0, 1, 1, 2], [0], [0]>} : vector<1x8x8xbf16>, vector<1x8x8xbf16>, vector<1x8x8xf32> -> vector<1x8x8xf32>
    "tpu.trace_stop"() : () -> ()
    %103 = arith.truncf %102 : vector<1x8x8xf32> to vector<1x8x8xbf16>
    %104 = vector.extract_strided_slice %45 {offsets = [0, 16], sizes = [8, 8], strides = [1, 1]} : vector<8x32xbf16> to vector<8x8xbf16>
    %105 = vector.shape_cast %104 : vector<8x8xbf16> to vector<1x8x8xbf16>
    %106 = vector.extract_strided_slice %54 {offsets = [0, 16], sizes = [8, 8], strides = [1, 1]} : vector<8x32xbf16> to vector<8x8xbf16>
    %107 = vector.shape_cast %106 : vector<8x8xbf16> to vector<1x8x8xbf16>
    %108 = vector.extract_strided_slice %63 {offsets = [0, 16], sizes = [8, 8], strides = [1, 1]} : vector<8x32xbf16> to vector<8x8xbf16>
    %109 = vector.shape_cast %108 : vector<8x8xbf16> to vector<1x8x8xbf16>
    "tpu.trace_start"() <{level = 10 : i32, message = "bqd,bkd->bqk"}> : () -> ()
    %cst_46 = arith.constant dense<0.000000e+00> : vector<1x8x8xf32>
    %110 = tpu.matmul %105, %107, %cst_46 {dimension_numbers = #tpu.dot_dimension_numbers<[2], [2], [1], [1], [0, 0, 0, 1, 1, 1], [0], [0]>} : vector<1x8x8xbf16>, vector<1x8x8xbf16>, vector<1x8x8xf32> -> vector<1x8x8xf32>
    "tpu.trace_stop"() : () -> ()
    %111 = arith.addf %110, %5 : vector<1x8x8xf32>
    %cst_47 = arith.constant dense<0xFF800000> : vector<1x8xf32>
    %112 = vector.multi_reduction <maximumf>, %111, %cst_47 [2] : vector<1x8x8xf32> to vector<1x8xf32>
    %113 = vector.shape_cast %112 : vector<1x8xf32> to vector<1x8x1xf32>
    %114 = vector.broadcast %113 : vector<1x8x1xf32> to vector<1x8x8xf32>
    %115 = arith.subf %111, %114 : vector<1x8x8xf32>
    %116 = math.exp %115 : vector<1x8x8xf32>
    %cst_48 = arith.constant dense<0.000000e+00> : vector<1x8xf32>
    %117 = vector.multi_reduction <add>, %116, %cst_48 [2] : vector<1x8x8xf32> to vector<1x8xf32>
    %118 = vector.shape_cast %117 : vector<1x8xf32> to vector<1x8x1xf32>
    %119 = vector.broadcast %118 : vector<1x8x1xf32> to vector<1x8x8xf32>
    %120 = arith.divf %116, %119 : vector<1x8x8xf32>
    %121 = arith.truncf %120 : vector<1x8x8xf32> to vector<1x8x8xbf16>
    "tpu.trace_start"() <{level = 10 : i32, message = "bqk,bkd->bqd"}> : () -> ()
    %cst_49 = arith.constant dense<0.000000e+00> : vector<1x8x8xf32>
    %122 = tpu.matmul %121, %109, %cst_49 {dimension_numbers = #tpu.dot_dimension_numbers<[2], [1], [1], [2], [0, 0, 0, 1, 1, 2], [0], [0]>} : vector<1x8x8xbf16>, vector<1x8x8xbf16>, vector<1x8x8xf32> -> vector<1x8x8xf32>
    "tpu.trace_stop"() : () -> ()
    %123 = arith.truncf %122 : vector<1x8x8xf32> to vector<1x8x8xbf16>
    %124 = vector.extract_strided_slice %45 {offsets = [0, 24], sizes = [8, 8], strides = [1, 1]} : vector<8x32xbf16> to vector<8x8xbf16>
    %125 = vector.shape_cast %124 : vector<8x8xbf16> to vector<1x8x8xbf16>
    %126 = vector.extract_strided_slice %54 {offsets = [0, 24], sizes = [8, 8], strides = [1, 1]} : vector<8x32xbf16> to vector<8x8xbf16>
    %127 = vector.shape_cast %126 : vector<8x8xbf16> to vector<1x8x8xbf16>
    %128 = vector.extract_strided_slice %63 {offsets = [0, 24], sizes = [8, 8], strides = [1, 1]} : vector<8x32xbf16> to vector<8x8xbf16>
    %129 = vector.shape_cast %128 : vector<8x8xbf16> to vector<1x8x8xbf16>
    "tpu.trace_start"() <{level = 10 : i32, message = "bqd,bkd->bqk"}> : () -> ()
    %cst_50 = arith.constant dense<0.000000e+00> : vector<1x8x8xf32>
    %130 = tpu.matmul %125, %127, %cst_50 {dimension_numbers = #tpu.dot_dimension_numbers<[2], [2], [1], [1], [0, 0, 0, 1, 1, 1], [0], [0]>} : vector<1x8x8xbf16>, vector<1x8x8xbf16>, vector<1x8x8xf32> -> vector<1x8x8xf32>
    "tpu.trace_stop"() : () -> ()
    %131 = arith.addf %130, %5 : vector<1x8x8xf32>
    %cst_51 = arith.constant dense<0xFF800000> : vector<1x8xf32>
    %132 = vector.multi_reduction <maximumf>, %131, %cst_51 [2] : vector<1x8x8xf32> to vector<1x8xf32>
    %133 = vector.shape_cast %132 : vector<1x8xf32> to vector<1x8x1xf32>
    %134 = vector.broadcast %133 : vector<1x8x1xf32> to vector<1x8x8xf32>
    %135 = arith.subf %131, %134 : vector<1x8x8xf32>
    %136 = math.exp %135 : vector<1x8x8xf32>
    %cst_52 = arith.constant dense<0.000000e+00> : vector<1x8xf32>
    %137 = vector.multi_reduction <add>, %136, %cst_52 [2] : vector<1x8x8xf32> to vector<1x8xf32>
    %138 = vector.shape_cast %137 : vector<1x8xf32> to vector<1x8x1xf32>
    %139 = vector.broadcast %138 : vector<1x8x1xf32> to vector<1x8x8xf32>
    %140 = arith.divf %136, %139 : vector<1x8x8xf32>
    %141 = arith.truncf %140 : vector<1x8x8xf32> to vector<1x8x8xbf16>
    "tpu.trace_start"() <{level = 10 : i32, message = "bqk,bkd->bqd"}> : () -> ()
    %cst_53 = arith.constant dense<0.000000e+00> : vector<1x8x8xf32>
    %142 = tpu.matmul %141, %129, %cst_53 {dimension_numbers = #tpu.dot_dimension_numbers<[2], [1], [1], [2], [0, 0, 0, 1, 1, 2], [0], [0]>} : vector<1x8x8xbf16>, vector<1x8x8xbf16>, vector<1x8x8xf32> -> vector<1x8x8xf32>
    "tpu.trace_stop"() : () -> ()
    %143 = arith.truncf %142 : vector<1x8x8xf32> to vector<1x8x8xbf16>
    %144 = tpu.concatenate %83, %103, %123, %143 in 2 : vector<1x8x8xbf16>, vector<1x8x8xbf16>, vector<1x8x8xbf16>, vector<1x8x8xbf16> -> vector<1x8x32xbf16>
    %145 = vector.shape_cast %144 : vector<1x8x32xbf16> to vector<8x32xbf16>
    %c0_54 = arith.constant 0 : index
    %c0_55 = arith.constant 0 : index
    %c0_56 = arith.constant 0 : index
    %146 = vector.load %arg12[%c0_54, %c0_55, %c0_56] : memref<1x32x32xbf16, #tpu.memory_space<vmem>>, vector<1x32x32xbf16>
    %147 = vector.shape_cast %146 : vector<1x32x32xbf16> to vector<32x32xbf16>
    %cst_57 = arith.constant dense<0.000000e+00> : vector<8x32xf32>
    %148 = tpu.matmul %145, %147, %cst_57 {dimension_numbers = #tpu.dot_dimension_numbers<[1], [0], [0], [1], [0, 0, 1, 1], [], []>} : vector<8x32xbf16>, vector<32x32xbf16>, vector<8x32xf32> -> vector<8x32xf32>
    %149 = arith.addf %4, %148 : vector<8x32xf32>
    %c0_58 = arith.constant 0 : index
    %c0_59 = arith.constant 0 : index
    %c0_60 = arith.constant 0 : index
    %150 = vector.load %arg13[%c0_58, %c0_59, %c0_60] : memref<1x1x32xf32, #tpu.memory_space<vmem>>, vector<1x1x32xf32>
    %151 = vector.shape_cast %150 : vector<1x1x32xf32> to vector<32xf32>
    %152 = vector.shape_cast %151 : vector<32xf32> to vector<1x32xf32>
    %153 = vector.broadcast %152 : vector<1x32xf32> to vector<8x32xf32>
    %154 = arith.addf %149, %153 : vector<8x32xf32>
    %c0_61 = arith.constant 0 : index
    %c0_62 = arith.constant 0 : index
    %c0_63 = arith.constant 0 : index
    %155 = vector.load %arg14[%c0_61, %c0_62, %c0_63] : memref<1x1x32xf32, #tpu.memory_space<vmem>>, vector<1x1x32xf32>
    %156 = vector.shape_cast %155 : vector<1x1x32xf32> to vector<32xf32>
    %c0_64 = arith.constant 0 : index
    %c0_65 = arith.constant 0 : index
    %c0_66 = arith.constant 0 : index
    %157 = vector.load %arg15[%c0_64, %c0_65, %c0_66] : memref<1x1x32xf32, #tpu.memory_space<vmem>>, vector<1x1x32xf32>
    %158 = vector.shape_cast %157 : vector<1x1x32xf32> to vector<32xf32>
    %cst_67 = arith.constant dense<0.000000e+00> : vector<8xf32>
    %159 = vector.multi_reduction <add>, %154, %cst_67 [1] : vector<8x32xf32> to vector<8xf32>
    %160 = vector.shape_cast %159 : vector<8xf32> to vector<8x1xf32>
    %cst_68 = arith.constant 3.200000e+01 : f32
    %161 = vector.broadcast %cst_68 : f32 to vector<8x1xf32>
    %162 = arith.divf %160, %161 : vector<8x1xf32>
    %163 = vector.broadcast %162 : vector<8x1xf32> to vector<8x32xf32>
    %164 = arith.subf %154, %163 : vector<8x32xf32>
    %165 = arith.mulf %164, %164 : vector<8x32xf32>
    %cst_69 = arith.constant dense<0.000000e+00> : vector<8xf32>
    %166 = vector.multi_reduction <add>, %165, %cst_69 [1] : vector<8x32xf32> to vector<8xf32>
    %167 = vector.shape_cast %166 : vector<8xf32> to vector<8x1xf32>
    %cst_70 = arith.constant 3.200000e+01 : f32
    %168 = vector.broadcast %cst_70 : f32 to vector<8x1xf32>
    %169 = arith.divf %167, %168 : vector<8x1xf32>
    %170 = vector.broadcast %162 : vector<8x1xf32> to vector<8x32xf32>
    %171 = arith.subf %154, %170 : vector<8x32xf32>
    %cst_71 = arith.constant 9.99999974E-6 : f32
    %172 = vector.broadcast %cst_71 : f32 to vector<8x1xf32>
    %173 = arith.addf %169, %172 : vector<8x1xf32>
    %174 = math.rsqrt %173 : vector<8x1xf32>
    %175 = vector.broadcast %174 : vector<8x1xf32> to vector<8x32xf32>
    %176 = arith.mulf %171, %175 : vector<8x32xf32>
    %177 = vector.shape_cast %156 : vector<32xf32> to vector<1x32xf32>
    %178 = vector.broadcast %177 : vector<1x32xf32> to vector<8x32xf32>
    %179 = arith.mulf %176, %178 : vector<8x32xf32>
    %180 = vector.shape_cast %158 : vector<32xf32> to vector<1x32xf32>
    %181 = vector.broadcast %180 : vector<1x32xf32> to vector<8x32xf32>
    %182 = arith.addf %179, %181 : vector<8x32xf32>
    %183 = arith.truncf %182 : vector<8x32xf32> to vector<8x32xbf16>
    %cst_72 = arith.constant 0.000000e+00 : f32
    %184 = vector.broadcast %cst_72 : f32 to vector<8x32xf32>
    %c0_73 = arith.constant 0 : index
    %c0_74 = arith.constant 0 : index
    %c0_75 = arith.constant 0 : index
    %185 = vector.load %arg16[%c0_73, %c0_74, %c0_75] : memref<1x32x128xbf16, #tpu.memory_space<vmem>>, vector<1x32x128xbf16>
    %186 = vector.shape_cast %185 : vector<1x32x128xbf16> to vector<32x128xbf16>
    %cst_76 = arith.constant dense<0.000000e+00> : vector<8x128xf32>
    %187 = tpu.matmul %183, %186, %cst_76 {dimension_numbers = #tpu.dot_dimension_numbers<[1], [0], [0], [1], [0, 0, 1, 1], [], []>} : vector<8x32xbf16>, vector<32x128xbf16>, vector<8x128xf32> -> vector<8x128xf32>
    %c0_77 = arith.constant 0 : index
    %c0_78 = arith.constant 0 : index
    %c0_79 = arith.constant 0 : index
    %188 = vector.load %arg17[%c0_77, %c0_78, %c0_79] : memref<1x1x128xf32, #tpu.memory_space<vmem>>, vector<1x1x128xf32>
    %189 = vector.shape_cast %188 : vector<1x1x128xf32> to vector<128xf32>
    %190 = vector.shape_cast %189 : vector<128xf32> to vector<1x128xf32>
    %191 = vector.broadcast %190 : vector<1x128xf32> to vector<8x128xf32>
    %192 = arith.addf %187, %191 : vector<8x128xf32>
    %cst_80 = arith.constant 5.000000e-01 : f32
    %193 = vector.broadcast %cst_80 : f32 to vector<8x128xf32>
    %194 = arith.mulf %193, %192 : vector<8x128xf32>
    %cst_81 = arith.constant 4.471500e-02 : f32
    %195 = vector.broadcast %cst_81 : f32 to vector<8x128xf32>
    %196 = arith.mulf %195, %192 : vector<8x128xf32>
    %197 = arith.mulf %196, %192 : vector<8x128xf32>
    %198 = arith.mulf %197, %192 : vector<8x128xf32>
    %199 = arith.addf %192, %198 : vector<8x128xf32>
    %cst_82 = arith.constant 0.797884583 : f32
    %200 = vector.broadcast %cst_82 : f32 to vector<8x128xf32>
    %201 = arith.mulf %200, %199 : vector<8x128xf32>
    %202 = math.tanh %201 : vector<8x128xf32>
    %cst_83 = arith.constant 1.000000e+00 : f32
    %203 = vector.broadcast %cst_83 : f32 to vector<8x128xf32>
    %204 = arith.addf %203, %202 : vector<8x128xf32>
    %205 = arith.mulf %194, %204 : vector<8x128xf32>
    %206 = arith.truncf %205 : vector<8x128xf32> to vector<8x128xbf16>
    %c0_84 = arith.constant 0 : index
    %c0_85 = arith.constant 0 : index
    %c0_86 = arith.constant 0 : index
    %207 = vector.load %arg18[%c0_84, %c0_85, %c0_86] : memref<1x128x32xbf16, #tpu.memory_space<vmem>>, vector<1x128x32xbf16>
    %208 = vector.shape_cast %207 : vector<1x128x32xbf16> to vector<128x32xbf16>
    %cst_87 = arith.constant dense<0.000000e+00> : vector<8x32xf32>
    %209 = tpu.matmul %206, %208, %cst_87 {dimension_numbers = #tpu.dot_dimension_numbers<[1], [0], [0], [1], [0, 0, 1, 1], [], []>} : vector<8x128xbf16>, vector<128x32xbf16>, vector<8x32xf32> -> vector<8x32xf32>
    %210 = arith.addf %184, %209 : vector<8x32xf32>
    %211 = arith.addf %154, %210 : vector<8x32xf32>
    %c0_88 = arith.constant 0 : index
    %c0_89 = arith.constant 0 : index
    %c0_90 = arith.constant 0 : index
    %212 = vector.load %arg19[%c0_88, %c0_89, %c0_90] : memref<1x1x32xf32, #tpu.memory_space<vmem>>, vector<1x1x32xf32>
    %213 = vector.shape_cast %212 : vector<1x1x32xf32> to vector<32xf32>
    %214 = vector.shape_cast %213 : vector<32xf32> to vector<1x32xf32>
    %215 = vector.broadcast %214 : vector<1x32xf32> to vector<8x32xf32>
    %216 = arith.addf %211, %215 : vector<8x32xf32>
    %217 = vector.shape_cast %216 : vector<8x32xf32> to vector<1x8x32xf32>
    %c1_i32 = arith.constant 1 : i32
    %218 = arith.cmpi slt, %arg1, %c1_i32 : i32
    %219 = arith.extui %218 : i1 to i32
    %c0_i32_91 = arith.constant 0 : i32
    %220 = arith.cmpi ne, %219, %c0_i32_91 : i32
    scf.if %220 {
      %c0_94 = arith.constant 0 : index
      %c0_95 = arith.constant 0 : index
      %c0_96 = arith.constant 0 : index
      %224 = vector.load %arg24[%c0_94, %c0_95, %c0_96] : memref<1x8x32xf32, #tpu.memory_space<vmem>>, vector<1x8x32xf32>
      tpu.vector_store %arg24[%c0_94, %c0_95, %c0_96], %217 {strides = array<i32>} : memref<1x8x32xf32, #tpu.memory_space<vmem>>, vector<1x8x32xf32>,
      %225 = arith.truncf %217 : vector<1x8x32xf32> to vector<1x8x32xbf16>
      %c0_97 = arith.constant 0 : index
      %c0_98 = arith.constant 0 : index
      %c0_99 = arith.constant 0 : index
      %c0_100 = arith.constant 0 : index
      %226 = vector.load %arg22[%c0_97, %c0_98, %c0_99, %c0_100] : memref<1x1x8x32xbf16, #tpu.memory_space<vmem>>, vector<1x1x8x32xbf16>
      %227 = vector.shape_cast %226 : vector<1x1x8x32xbf16> to vector<1x8x32xbf16>
      %228 = vector.shape_cast %225 : vector<1x8x32xbf16> to vector<1x1x8x32xbf16>
      tpu.vector_store %arg22[%c0_97, %c0_98, %c0_99, %c0_100], %228 {strides = array<i32>} : memref<1x1x8x32xbf16, #tpu.memory_space<vmem>>, vector<1x1x8x32xbf16>,
    } else {
    }
    %c1_i32_92 = arith.constant 1 : i32
    %221 = arith.cmpi eq, %arg1, %c1_i32_92 : i32
    %222 = arith.extui %221 : i1 to i32
    %c0_i32_93 = arith.constant 0 : i32
    %223 = arith.cmpi ne, %222, %c0_i32_93 : i32
    scf.if %223 {
      %c0_94 = arith.constant 0 : index
      %c0_95 = arith.constant 0 : index
      %224 = vector.load %arg20[%c0_94, %c0_95] : memref<1x32xf32, #tpu.memory_space<vmem>>, vector<1x32xf32>
      %225 = vector.shape_cast %224 : vector<1x32xf32> to vector<32xf32>
      %c0_96 = arith.constant 0 : index
      %c0_97 = arith.constant 0 : index
      %226 = vector.load %arg21[%c0_96, %c0_97] : memref<1x32xf32, #tpu.memory_space<vmem>>, vector<1x32xf32>
      %227 = vector.shape_cast %226 : vector<1x32xf32> to vector<32xf32>
      %cst_98 = arith.constant dense<0.000000e+00> : vector<8xf32>
      %228 = vector.multi_reduction <add>, %216, %cst_98 [1] : vector<8x32xf32> to vector<8xf32>
      %229 = vector.shape_cast %228 : vector<8xf32> to vector<8x1xf32>
      %cst_99 = arith.constant 3.200000e+01 : f32
      %230 = vector.broadcast %cst_99 : f32 to vector<8x1xf32>
      %231 = arith.divf %229, %230 : vector<8x1xf32>
      %232 = vector.broadcast %231 : vector<8x1xf32> to vector<8x32xf32>
      %233 = arith.subf %216, %232 : vector<8x32xf32>
      %234 = arith.mulf %233, %233 : vector<8x32xf32>
      %cst_100 = arith.constant dense<0.000000e+00> : vector<8xf32>
      %235 = vector.multi_reduction <add>, %234, %cst_100 [1] : vector<8x32xf32> to vector<8xf32>
      %236 = vector.shape_cast %235 : vector<8xf32> to vector<8x1xf32>
      %cst_101 = arith.constant 3.200000e+01 : f32
      %237 = vector.broadcast %cst_101 : f32 to vector<8x1xf32>
      %238 = arith.divf %236, %237 : vector<8x1xf32>
      %239 = vector.broadcast %231 : vector<8x1xf32> to vector<8x32xf32>
      %240 = arith.subf %216, %239 : vector<8x32xf32>
      %cst_102 = arith.constant 9.99999974E-6 : f32
      %241 = vector.broadcast %cst_102 : f32 to vector<8x1xf32>
      %242 = arith.addf %238, %241 : vector<8x1xf32>
      %243 = math.rsqrt %242 : vector<8x1xf32>
      %244 = vector.broadcast %243 : vector<8x1xf32> to vector<8x32xf32>
      %245 = arith.mulf %240, %244 : vector<8x32xf32>
      %246 = vector.shape_cast %225 : vector<32xf32> to vector<1x32xf32>
      %247 = vector.broadcast %246 : vector<1x32xf32> to vector<8x32xf32>
      %248 = arith.mulf %245, %247 : vector<8x32xf32>
      %249 = vector.shape_cast %227 : vector<32xf32> to vector<1x32xf32>
      %250 = vector.broadcast %249 : vector<1x32xf32> to vector<8x32xf32>
      %251 = arith.addf %248, %250 : vector<8x32xf32>
      %252 = vector.shape_cast %251 : vector<8x32xf32> to vector<1x8x32xf32>
      %253 = arith.truncf %252 : vector<1x8x32xf32> to vector<1x8x32xbf16>
      %c0_103 = arith.constant 0 : index
      %c0_104 = arith.constant 0 : index
      %c0_105 = arith.constant 0 : index
      %c0_106 = arith.constant 0 : index
      %254 = vector.load %arg22[%c0_103, %c0_104, %c0_105, %c0_106] : memref<1x1x8x32xbf16, #tpu.memory_space<vmem>>, vector<1x1x8x32xbf16>
      %255 = vector.shape_cast %254 : vector<1x1x8x32xbf16> to vector<1x8x32xbf16>
      %256 = vector.shape_cast %253 : vector<1x8x32xbf16> to vector<1x1x8x32xbf16>
      tpu.vector_store %arg22[%c0_103, %c0_104, %c0_105, %c0_106], %256 {strides = array<i32>} : memref<1x1x8x32xbf16, #tpu.memory_space<vmem>>, vector<1x1x8x32xbf16>,
      %c0_107 = arith.constant 0 : index
      %c0_108 = arith.constant 0 : index
      %c0_109 = arith.constant 0 : index
      %257 = vector.load %arg3[%c0_107, %c0_108, %c0_109] : memref<1x1x8xf32, #tpu.memory_space<vmem>>, vector<1x1x8xf32>
      %258 = vector.shape_cast %257 : vector<1x1x8xf32> to vector<1x8x1xf32>
      %259 = vector.broadcast %258 : vector<1x8x1xf32> to vector<1x8x32xf32>
      %260 = arith.mulf %252, %259 : vector<1x8x32xf32>
      %c0_110 = arith.constant 0 : index
      %c0_111 = arith.constant 0 : index
      %c0_112 = arith.constant 0 : index
      %261 = vector.load %arg23[%c0_110, %c0_111, %c0_112] : memref<1x8x32xf32, #tpu.memory_space<vmem>>, vector<1x8x32xf32>
      tpu.vector_store %arg23[%c0_110, %c0_111, %c0_112], %260 {strides = array<i32>} : memref<1x8x32xf32, #tpu.memory_space<vmem>>, vector<1x8x32xf32>,
    } else {
    }
    return
  }
  func.func @transform_0(%arg0: i32, %arg1: i32) -> (i32, i32, i32) {
    %c0_i32 = arith.constant 0 : i32
    %c0_i32_0 = arith.constant 0 : i32
    %c0_i32_1 = arith.constant 0 : i32
    return %arg0, %c0_i32, %c0_i32_0 : i32, i32, i32
  }
  func.func @transform_1(%arg0: i32, %arg1: i32) -> (i32, i32, i32) {
    %c0_i32 = arith.constant 0 : i32
    %c0_i32_0 = arith.constant 0 : i32
    %c0_i32_1 = arith.constant 0 : i32
    return %arg0, %c0_i32, %c0_i32_0 : i32, i32, i32
  }
  func.func @transform_2(%arg0: i32, %arg1: i32) -> (i32, i32, i32) {
    %c0_i32 = arith.constant 0 : i32
    %c0_i32_0 = arith.constant 0 : i32
    %c0_i32_1 = arith.constant 0 : i32
    return %arg1, %c0_i32, %c0_i32_0 : i32, i32, i32
  }
  func.func @transform_3(%arg0: i32, %arg1: i32) -> (i32, i32, i32) {
    %c0_i32 = arith.constant 0 : i32
    %c0_i32_0 = arith.constant 0 : i32
    %c0_i32_1 = arith.constant 0 : i32
    return %arg1, %c0_i32, %c0_i32_0 : i32, i32, i32
  }
  func.func @transform_4(%arg0: i32, %arg1: i32) -> (i32, i32, i32) {
    %c0_i32 = arith.constant 0 : i32
    %c0_i32_0 = arith.constant 0 : i32
    %c0_i32_1 = arith.constant 0 : i32
    return %arg1, %c0_i32, %c0_i32_0 : i32, i32, i32
  }
  func.func @transform_5(%arg0: i32, %arg1: i32) -> (i32, i32, i32) {
    %c0_i32 = arith.constant 0 : i32
    %c0_i32_0 = arith.constant 0 : i32
    %c0_i32_1 = arith.constant 0 : i32
    return %arg1, %c0_i32, %c0_i32_0 : i32, i32, i32
  }
  func.func @transform_6(%arg0: i32, %arg1: i32) -> (i32, i32, i32) {
    %c0_i32 = arith.constant 0 : i32
    %c0_i32_0 = arith.constant 0 : i32
    %c0_i32_1 = arith.constant 0 : i32
    return %arg1, %c0_i32, %c0_i32_0 : i32, i32, i32
  }
  func.func @transform_7(%arg0: i32, %arg1: i32) -> (i32, i32, i32) {
    %c0_i32 = arith.constant 0 : i32
    %c0_i32_0 = arith.constant 0 : i32
    %c0_i32_1 = arith.constant 0 : i32
    return %arg1, %c0_i32, %c0_i32_0 : i32, i32, i32
  }
  func.func @transform_8(%arg0: i32, %arg1: i32) -> (i32, i32, i32) {
    %c0_i32 = arith.constant 0 : i32
    %c0_i32_0 = arith.constant 0 : i32
    %c0_i32_1 = arith.constant 0 : i32
    return %arg1, %c0_i32, %c0_i32_0 : i32, i32, i32
  }
  func.func @transform_9(%arg0: i32, %arg1: i32) -> (i32, i32, i32) {
    %c0_i32 = arith.constant 0 : i32
    %c0_i32_0 = arith.constant 0 : i32
    %c0_i32_1 = arith.constant 0 : i32
    return %arg1, %c0_i32, %c0_i32_0 : i32, i32, i32
  }
  func.func @transform_10(%arg0: i32, %arg1: i32) -> (i32, i32, i32) {
    %c0_i32 = arith.constant 0 : i32
    %c0_i32_0 = arith.constant 0 : i32
    %c0_i32_1 = arith.constant 0 : i32
    return %arg1, %c0_i32, %c0_i32_0 : i32, i32, i32
  }
  func.func @transform_11(%arg0: i32, %arg1: i32) -> (i32, i32, i32) {
    %c0_i32 = arith.constant 0 : i32
    %c0_i32_0 = arith.constant 0 : i32
    %c0_i32_1 = arith.constant 0 : i32
    return %arg1, %c0_i32, %c0_i32_0 : i32, i32, i32
  }
  func.func @transform_12(%arg0: i32, %arg1: i32) -> (i32, i32, i32) {
    %c0_i32 = arith.constant 0 : i32
    %c0_i32_0 = arith.constant 0 : i32
    %c0_i32_1 = arith.constant 0 : i32
    return %arg1, %c0_i32, %c0_i32_0 : i32, i32, i32
  }
  func.func @transform_13(%arg0: i32, %arg1: i32) -> (i32, i32, i32) {
    %c0_i32 = arith.constant 0 : i32
    %c0_i32_0 = arith.constant 0 : i32
    %c0_i32_1 = arith.constant 0 : i32
    return %arg1, %c0_i32, %c0_i32_0 : i32, i32, i32
  }
  func.func @transform_14(%arg0: i32, %arg1: i32) -> (i32, i32, i32) {
    %c0_i32 = arith.constant 0 : i32
    %c0_i32_0 = arith.constant 0 : i32
    %c0_i32_1 = arith.constant 0 : i32
    return %arg1, %c0_i32, %c0_i32_0 : i32, i32, i32
  }
  func.func @transform_15(%arg0: i32, %arg1: i32) -> (i32, i32, i32) {
    %c0_i32 = arith.constant 0 : i32
    %c0_i32_0 = arith.constant 0 : i32
    %c0_i32_1 = arith.constant 0 : i32
    return %arg1, %c0_i32, %c0_i32_0 : i32, i32, i32
  }
  func.func @transform_16(%arg0: i32, %arg1: i32) -> (i32, i32, i32) {
    %c0_i32 = arith.constant 0 : i32
    %c0_i32_0 = arith.constant 0 : i32
    %c0_i32_1 = arith.constant 0 : i32
    return %arg1, %c0_i32, %c0_i32_0 : i32, i32, i32
  }
  func.func @transform_17(%arg0: i32, %arg1: i32) -> (i32, i32, i32) {
    %c0_i32 = arith.constant 0 : i32
    %c0_i32_0 = arith.constant 0 : i32
    %c0_i32_1 = arith.constant 0 : i32
    return %arg1, %c0_i32, %c0_i32_0 : i32, i32, i32
  }
  func.func @transform_18(%arg0: i32, %arg1: i32) -> (i32, i32) {
    %c0_i32 = arith.constant 0 : i32
    %c0_i32_0 = arith.constant 0 : i32
    %c0_i32_1 = arith.constant 0 : i32
    return %c0_i32, %c0_i32_0 : i32, i32
  }
  func.func @transform_19(%arg0: i32, %arg1: i32) -> (i32, i32) {
    %c0_i32 = arith.constant 0 : i32
    %c0_i32_0 = arith.constant 0 : i32
    %c0_i32_1 = arith.constant 0 : i32
    return %c0_i32, %c0_i32_0 : i32, i32
  }
  func.func @transform_20(%arg0: i32, %arg1: i32) -> (i32, i32, i32, i32) {
    %c0_i32 = arith.constant 0 : i32
    %c0_i32_0 = arith.constant 0 : i32
    %c0_i32_1 = arith.constant 0 : i32
    return %arg1, %arg0, %c0_i32, %c0_i32_0 : i32, i32, i32, i32
  }
  func.func @transform_21(%arg0: i32, %arg1: i32) -> (i32, i32, i32) {
    %c0_i32 = arith.constant 0 : i32
    %c0_i32_0 = arith.constant 0 : i32
    %c0_i32_1 = arith.constant 0 : i32
    return %arg0, %c0_i32, %c0_i32_0 : i32, i32, i32
  }
}

</mosaic_0001>

<llo_original>
// kernel: tpu_custom_call.1
$region0: #{tpu_custom_call.1}
  #allocation0 [shape = 'u32[]', space=smem, size = 0x4, offset = 0x4, fixed_abs, tag = 'smem constant byte address 0x4 - core index']
  #allocation1 [shape = 'u32[72,128]{1,0:T(1,128)}', space=vmem, size = 0x9000, scoped, tag = 'internal scratch']
  #allocation2 [shape = 'f32[1,8,32]{2,1,0:T(8,128)}', space=vmem, size = 0x1000, scoped, tag = 'scratch operand']
  #allocation3 [shape = 'f32[1,8,8]{2,1,0:T(8,128)}', space=vmem, size = 0x1000, scoped, tag = 'scratch operand']
  %s0 = inlined_call_operand.hbm [shape: bf16[2,8,32], index: 0, kind: input, shape index: {}]
  %s1 = inlined_call_operand.hbm [shape: f32[2,1,8], index: 1, kind: input, shape index: {}]
  %s2 = inlined_call_operand.hbm [shape: f32[2,1,32], index: 2, kind: input, shape index: {}]
  %s3 = inlined_call_operand.hbm [shape: f32[2,1,32], index: 3, kind: input, shape index: {}]
  %s4 = inlined_call_operand.vmem [shape: bf16[2,32,32], index: 4, kind: input, shape index: {}]
  %s5 = inlined_call_operand.vmem [shape: f32[2,1,32], index: 5, kind: input, shape index: {}]
  %s6 = inlined_call_operand.vmem [shape: bf16[2,32,32], index: 6, kind: input, shape index: {}]
  %s7 = inlined_call_operand.vmem [shape: f32[2,1,32], index: 7, kind: input, shape index: {}]
  %s8 = inlined_call_operand.vmem [shape: bf16[2,32,32], index: 8, kind: input, shape index: {}]
  %s9 = inlined_call_operand.vmem [shape: f32[2,1,32], index: 9, kind: input, shape index: {}]
  %s10 = inlined_call_operand.vmem [shape: bf16[2,32,32], index: 10, kind: input, shape index: {}]
  %s11 = inlined_call_operand.vmem [shape: f32[2,1,32], index: 11, kind: input, shape index: {}]
  %s12 = inlined_call_operand.vmem [shape: f32[2,1,32], index: 12, kind: input, shape index: {}]
  %s13 = inlined_call_operand.hbm [shape: f32[2,1,32], index: 13, kind: input, shape index: {}]
  %s14 = inlined_call_operand.vmem [shape: bf16[2,32,128], index: 14, kind: input, shape index: {}]
  %s15 = inlined_call_operand.vmem [shape: f32[2,1,128], index: 15, kind: input, shape index: {}]
  %s16 = inlined_call_operand.vmem [shape: bf16[2,128,32], index: 16, kind: input, shape index: {}]
  %s17 = inlined_call_operand.vmem [shape: f32[2,1,32], index: 17, kind: input, shape index: {}]
  %s18 = inlined_call_operand.vmem [shape: f32[1,32], index: 18, kind: input, shape index: {}]
  %s19 = inlined_call_operand.vmem [shape: f32[1,32], index: 19, kind: input, shape index: {}]
  %s20 = inlined_call_operand.hbm [shape: bf16[2,2,8,32], index: 20, kind: output, shape index: {0}]
  %s21 = inlined_call_operand.hbm [shape: f32[2,8,32], index: 21, kind: output, shape index: {1}]
  %22 = xla_tuple %s20, %s21
  %s23 = sld [smem:[#allocation0]]
  $region153: #{tpu_custom_call.1} parent=0
    _
  %s25 = ssub.s32 1, %s23
  %s26 = scalar_select 0, %s25, %s23
  $region1: #{tpu_custom_call.1} parent=0
    #allocation4 [shape = 'u8[4096]{0}', space=vmem, size = 0x1000, scoped, tag = 'input window, operand 0']
    #allocation5 [shape = 's32[2]{0}', space=sflag, size = 0x8, scoped, tag = 'scoped memory for tpu_custom_call.1']
    #allocation6 [shape = 's32[2]{0}', space=sflag, size = 0x8, scoped, tag = 'scoped memory for tpu_custom_call.1']
    #allocation7 [shape = 'u8[1024]{0}', space=vmem, size = 0x400, scoped, tag = 'input window, operand 1']
    #allocation8 [shape = 's32[2]{0}', space=sflag, size = 0x8, scoped, tag = 'scoped memory for tpu_custom_call.1']
    #allocation9 [shape = 'u8[1024]{0}', space=vmem, size = 0x400, scoped, tag = 'input window, operand 2']
    #allocation10 [shape = 'u8[1024]{0}', space=vmem, size = 0x400, scoped, tag = 'input window, operand 3']
    #allocation11 [shape = 's32[2]{0}', space=sflag, size = 0x8, scoped, tag = 'scoped memory for tpu_custom_call.1']
    #allocation12 [shape = 'u8[1024]{0}', space=vmem, size = 0x400, scoped, tag = 'input window, operand 13']
    #allocation13 [shape = 'u8[4096]{0}', space=vmem, size = 0x1000, scoped, tag = 'output window, operand 0']
    #allocation14 [shape = 'u8[8192]{0}', space=vmem, size = 0x2000, scoped, tag = 'output window, operand 1']
    #allocation15 [shape = 's32[2]{0}', space=sflag, size = 0x8, scoped, tag = 'scoped memory for tpu_custom_call.1']
    %27 = vsyncpa [#allocation5], 0
    %s28 = scalar_lea.sflag [#allocation5], 1
    %29 = vsyncpa %s28, 0
    %30 = vsyncpa [#allocation8], 0
    %s31 = scalar_lea.sflag [#allocation8], 1
    %32 = vsyncpa %s31, 0
    %33 = vsyncpa [#allocation11], 0
    %s34 = scalar_lea.sflag [#allocation11], 1
    %35 = vsyncpa %s34, 0
    %36 = vsyncpa [#allocation6], 0
    %s37 = scalar_lea.sflag [#allocation6], 1
    %38 = vsyncpa %s37, 0
    %39 = vsyncpa [#allocation15], 0
    %s40 = scalar_lea.sflag [#allocation15], 1
    %41 = vsyncpa %s40, 0
    loop: start=0, step=1, limit=6
    $region2: #{tpu_custom_call.1} parent=1 // loop_pre_header
      _
    $region3: #{tpu_custom_call.1} parent=1 // loop_header
      %s43 = sphi 0, %s47
      %p44 = scmp.ge.s32.totalorder %s43, 6
      %s50 = sphi 0, %s62
      %s51 = sphi 0, %s58
      %s52 = sphi 0, %s50
      %s53 = sphi 0, %s51
      %s54 = sphi 0, %s52
      %s55 = sphi 0, %s53
      %s65 = sphi 0, %s67
      %s68 = sphi 0, %s65
      %s69 = sphi 0, %s68
      %s85 = sphi 0, %s69
      %s91 = sphi 0, %s93
      %s94 = sphi 0, %s91
      %s95 = sphi 0, %s94
      %s111 = sphi 0, %s95
      %s117 = sphi 0, %s119
      %s120 = sphi 0, %s117
      %s121 = sphi 0, %s120
      %s137 = sphi 0, %s121
      %s143 = sphi 0, %s145
      %s146 = sphi 0, %s143
      %s147 = sphi 0, %s146
      %s163 = sphi 0, %s147
      %s169 = sphi 0, %s171
      %s172 = sphi 0, %s169
      %s173 = sphi 0, %s172
      %s189 = sphi 0, %s173
      %s195 = sphi 0, %s197
      %s198 = sphi 0, %s195
      %s199 = sphi 0, %s198
      %s215 = sphi 0, %s199
      %s221 = sphi 0, %s223
      %s224 = sphi 0, %s221
      %s225 = sphi 0, %s224
      %s241 = sphi 0, %s225
      %s247 = sphi 0, %s249
      %s250 = sphi 0, %s247
      %s251 = sphi 0, %s250
      %s267 = sphi 0, %s251
      %s273 = sphi 0, %s275
      %s276 = sphi 0, %s273
      %s277 = sphi 0, %s276
      %s293 = sphi 0, %s277
      %s299 = sphi 0, %s301
      %s302 = sphi 0, %s299
      %s303 = sphi 0, %s302
      %s319 = sphi 0, %s303
      %s325 = sphi 0, %s327
      %s328 = sphi 0, %s325
      %s329 = sphi 0, %s328
      %s345 = sphi 0, %s329
      %s351 = sphi 0, %s353
      %s354 = sphi 0, %s351
      %s355 = sphi 0, %s354
      %s371 = sphi 0, %s355
      %s377 = sphi 0, %s379
      %s380 = sphi 0, %s377
      %s381 = sphi 0, %s380
      %s397 = sphi 0, %s381
      %s403 = sphi 0, %s405
      %s406 = sphi 0, %s403
      %s407 = sphi 0, %s406
      %s423 = sphi 0, %s407
      %s429 = sphi 0, %s431
      %s432 = sphi 0, %s429
      %s433 = sphi 0, %s432
      %s449 = sphi 0, %s433
      %s455 = sphi 0, %s457
      %s458 = sphi 0, %s455
      %s459 = sphi 0, %s458
      %s475 = sphi 0, %s459
      %s481 = sphi 0, %s483
      %s484 = sphi 0, %s481
      %s485 = sphi 0, %s484
      %s501 = sphi 0, %s485
      %s507 = sphi 0, %s509
      %s510 = sphi 0, %s507
      %s511 = sphi 0, %s510
      %s527 = sphi 0, %s511
      %s531 = sphi 0, %s531
      %s533 = sphi 0, %s531
      %s534 = sphi 0, %s533
      %s548 = sphi 0, %s534
      %s552 = sphi 0, %s552
      %s554 = sphi 0, %s552
      %s555 = sphi 0, %s554
      %s569 = sphi 0, %s555
      %s577 = sphi 0, %s579
      %s580 = sphi 0, %s577
      %s581 = sphi 0, %s580
      %s597 = sphi 0, %s581
      %s603 = sphi 0, %s605
      %s606 = sphi 0, %s603
      %s607 = sphi 0, %s606
      %s623 = sphi 0, %s607
    $region4: #{tpu_custom_call.1} parent=1 // loop_header_branch
      %46 = sbr.rel (%p44) target = $region8
    $region5: #{tpu_custom_call.1} parent=1 // loop_body
      %s48 = ssub.s32 %s43, 1
      %s49 = ssub.s32 %s43, 2
      %s56 = sadd.s32 1, %s51
      %p57 = scmp.ge.s32.totalorder %s56, 2
      %s58 = scalar_select %p57, 0, %s56
      %s59 = sadd.s32 1, %s50
      %s60 = scalar_select %p57, %s59, %s50
      %p61 = scmp.ge.s32.totalorder %s60, 2
      %s62 = scalar_select %p61, 0, %s60
      %s63 = ssub.s32 %s50, %s62
      %p64 = scmp.eq.s32.totalorder %s63, 0
      %s66 = sadd.s32 %s65, 1
      %s67 = scalar_select %p64, %s65, %s66
      %p70 = pneg %p64
      %p71 = scmp.eq.s32.totalorder %s43, 3
      %p72 = por %p70, %p71
      %p73 = scmp.ne.s32.totalorder %s65, %s68
      %p74 = scmp.eq.s32.totalorder %s43, 0
      %p75 = por %p73, %p74
      %p76 = scmp.ne.s32.totalorder %s65, %s68
      %p77 = scmp.eq.s32.totalorder %s48, 3
      %p78 = por %p76, %p77
      %p79 = scmp.ne.s32.totalorder %s68, %s69
      %p80 = scmp.eq.s32.totalorder %s48, 0
      %p81 = por %p79, %p80
      %p82 = scmp.ne.s32.totalorder %s68, %s69
      %p83 = scmp.eq.s32.totalorder %s49, 3
      %p84 = por %p82, %p83
      %p86 = scmp.ne.s32.totalorder %s69, %s85
      %p87 = scmp.eq.s32.totalorder %s49, 0
      %p88 = por %p86, %p87
      %s89 = ssub.s32 %s50, %s62
      %p90 = scmp.eq.s32.totalorder %s89, 0
      %s92 = sadd.s32 %s91, 1
      %s93 = scalar_select %p90, %s91, %s92
      %p96 = pneg %p90
      %p97 = scmp.eq.s32.totalorder %s43, 3
      %p98 = por %p96, %p97
      %p99 = scmp.ne.s32.totalorder %s91, %s94
      %p100 = scmp.eq.s32.totalorder %s43, 0
      %p101 = por %p99, %p100
      %p102 = scmp.ne.s32.totalorder %s91, %s94
      %p103 = scmp.eq.s32.totalorder %s48, 3
      %p104 = por %p102, %p103
      %p105 = scmp.ne.s32.totalorder %s94, %s95
      %p106 = scmp.eq.s32.totalorder %s48, 0
      %p107 = por %p105, %p106
      %p108 = scmp.ne.s32.totalorder %s94, %s95
      %p109 = scmp.eq.s32.totalorder %s49, 3
      %p110 = por %p108, %p109
      %p112 = scmp.ne.s32.totalorder %s95, %s111
      %p113 = scmp.eq.s32.totalorder %s49, 0
      %p114 = por %p112, %p113
      %s115 = ssub.s32 %s51, %s58
      %p116 = scmp.eq.s32.totalorder %s115, 0
      %s118 = sadd.s32 %s117, 1
      %s119 = scalar_select %p116, %s117, %s118
      %p122 = pneg %p116
      %p123 = scmp.eq.s32.totalorder %s43, 3
      %p124 = por %p122, %p123
      %p125 = scmp.ne.s32.totalorder %s117, %s120
      %p126 = scmp.eq.s32.totalorder %s43, 0
      %p127 = por %p125, %p126
      %p128 = scmp.ne.s32.totalorder %s117, %s120
      %p129 = scmp.eq.s32.totalorder %s48, 3
      %p130 = por %p128, %p129
      %p131 = scmp.ne.s32.totalorder %s120, %s121
      %p132 = scmp.eq.s32.totalorder %s48, 0
      %p133 = por %p131, %p132
      %p134 = scmp.ne.s32.totalorder %s120, %s121
      %p135 = scmp.eq.s32.totalorder %s49, 3
      %p136 = por %p134, %p135
      %p138 = scmp.ne.s32.totalorder %s121, %s137
      %p139 = scmp.eq.s32.totalorder %s49, 0
      %p140 = por %p138, %p139
      %s141 = ssub.s32 %s51, %s58
      %p142 = scmp.eq.s32.totalorder %s141, 0
      %s144 = sadd.s32 %s143, 1
      %s145 = scalar_select %p142, %s143, %s144
      %p148 = pneg %p142
      %p149 = scmp.eq.s32.totalorder %s43, 3
      %p150 = por %p148, %p149
      %p151 = scmp.ne.s32.totalorder %s143, %s146
      %p152 = scmp.eq.s32.totalorder %s43, 0
      %p153 = por %p151, %p152
      %p154 = scmp.ne.s32.totalorder %s143, %s146
      %p155 = scmp.eq.s32.totalorder %s48, 3
      %p156 = por %p154, %p155
      %p157 = scmp.ne.s32.totalorder %s146, %s147
      %p158 = scmp.eq.s32.totalorder %s48, 0
      %p159 = por %p157, %p158
      %p160 = scmp.ne.s32.totalorder %s146, %s147
      %p161 = scmp.eq.s32.totalorder %s49, 3
      %p162 = por %p160, %p161
      %p164 = scmp.ne.s32.totalorder %s147, %s163
      %p165 = scmp.eq.s32.totalorder %s49, 0
      %p166 = por %p164, %p165
      %s167 = ssub.s32 %s51, %s58
      %p168 = scmp.eq.s32.totalorder %s167, 0
      %s170 = sadd.s32 %s169, 1
      %s171 = scalar_select %p168, %s169, %s170
      %p174 = pneg %p168
      %p175 = scmp.eq.s32.totalorder %s43, 3
      %p176 = por %p174, %p175
      %p177 = scmp.ne.s32.totalorder %s169, %s172
      %p178 = scmp.eq.s32.totalorder %s43, 0
      %p179 = por %p177, %p178
      %p180 = scmp.ne.s32.totalorder %s169, %s172
      %p181 = scmp.eq.s32.totalorder %s48, 3
      %p182 = por %p180, %p181
      %p183 = scmp.ne.s32.totalorder %s172, %s173
      %p184 = scmp.eq.s32.totalorder %s48, 0
      %p185 = por %p183, %p184
      %p186 = scmp.ne.s32.totalorder %s172, %s173
      %p187 = scmp.eq.s32.totalorder %s49, 3
      %p188 = por %p186, %p187
      %p190 = scmp.ne.s32.totalorder %s173, %s189
      %p191 = scmp.eq.s32.totalorder %s49, 0
      %p192 = por %p190, %p191
      %s193 = ssub.s32 %s51, %s58
      %p194 = scmp.eq.s32.totalorder %s193, 0
      %s196 = sadd.s32 %s195, 1
      %s197 = scalar_select %p194, %s195, %s196
      %p200 = pneg %p194
      %p201 = scmp.eq.s32.totalorder %s43, 3
      %p202 = por %p200, %p201
      %p203 = scmp.ne.s32.totalorder %s195, %s198
      %p204 = scmp.eq.s32.totalorder %s43, 0
      %p205 = por %p203, %p204
      %p206 = scmp.ne.s32.totalorder %s195, %s198
      %p207 = scmp.eq.s32.totalorder %s48, 3
      %p208 = por %p206, %p207
      %p209 = scmp.ne.s32.totalorder %s198, %s199
      %p210 = scmp.eq.s32.totalorder %s48, 0
      %p211 = por %p209, %p210
      %p212 = scmp.ne.s32.totalorder %s198, %s199
      %p213 = scmp.eq.s32.totalorder %s49, 3
      %p214 = por %p212, %p213
      %p216 = scmp.ne.s32.totalorder %s199, %s215
      %p217 = scmp.eq.s32.totalorder %s49, 0
      %p218 = por %p216, %p217
      %s219 = ssub.s32 %s51, %s58
      %p220 = scmp.eq.s32.totalorder %s219, 0
      %s222 = sadd.s32 %s221, 1
      %s223 = scalar_select %p220, %s221, %s222
      %p226 = pneg %p220
      %p227 = scmp.eq.s32.totalorder %s43, 3
      %p228 = por %p226, %p227
      %p229 = scmp.ne.s32.totalorder %s221, %s224
      %p230 = scmp.eq.s32.totalorder %s43, 0
      %p231 = por %p229, %p230
      %p232 = scmp.ne.s32.totalorder %s221, %s224
      %p233 = scmp.eq.s32.totalorder %s48, 3
      %p234 = por %p232, %p233
      %p235 = scmp.ne.s32.totalorder %s224, %s225
      %p236 = scmp.eq.s32.totalorder %s48, 0
      %p237 = por %p235, %p236
      %p238 = scmp.ne.s32.totalorder %s224, %s225
      %p239 = scmp.eq.s32.totalorder %s49, 3
      %p240 = por %p238, %p239
      %p242 = scmp.ne.s32.totalorder %s225, %s241
      %p243 = scmp.eq.s32.totalorder %s49, 0
      %p244 = por %p242, %p243
      %s245 = ssub.s32 %s51, %s58
      %p246 = scmp.eq.s32.totalorder %s245, 0
      %s248 = sadd.s32 %s247, 1
      %s249 = scalar_select %p246, %s247, %s248
      %p252 = pneg %p246
      %p253 = scmp.eq.s32.totalorder %s43, 3
      %p254 = por %p252, %p253
      %p255 = scmp.ne.s32.totalorder %s247, %s250
      %p256 = scmp.eq.s32.totalorder %s43, 0
      %p257 = por %p255, %p256
      %p258 = scmp.ne.s32.totalorder %s247, %s250
      %p259 = scmp.eq.s32.totalorder %s48, 3
      %p260 = por %p258, %p259
      %p261 = scmp.ne.s32.totalorder %s250, %s251
      %p262 = scmp.eq.s32.totalorder %s48, 0
      %p263 = por %p261, %p262
      %p264 = scmp.ne.s32.totalorder %s250, %s251
      %p265 = scmp.eq.s32.totalorder %s49, 3
      %p266 = por %p264, %p265
      %p268 = scmp.ne.s32.totalorder %s251, %s267
      %p269 = scmp.eq.s32.totalorder %s49, 0
      %p270 = por %p268, %p269
      %s271 = ssub.s32 %s51, %s58
      %p272 = scmp.eq.s32.totalorder %s271, 0
      %s274 = sadd.s32 %s273, 1
      %s275 = scalar_select %p272, %s273, %s274
      %p278 = pneg %p272
      %p279 = scmp.eq.s32.totalorder %s43, 3
      %p280 = por %p278, %p279
      %p281 = scmp.ne.s32.totalorder %s273, %s276
      %p282 = scmp.eq.s32.totalorder %s43, 0
      %p283 = por %p281, %p282
      %p284 = scmp.ne.s32.totalorder %s273, %s276
      %p285 = scmp.eq.s32.totalorder %s48, 3
      %p286 = por %p284, %p285
      %p287 = scmp.ne.s32.totalorder %s276, %s277
      %p288 = scmp.eq.s32.totalorder %s48, 0
      %p289 = por %p287, %p288
      %p290 = scmp.ne.s32.totalorder %s276, %s277
      %p291 = scmp.eq.s32.totalorder %s49, 3
      %p292 = por %p290, %p291
      %p294 = scmp.ne.s32.totalorder %s277, %s293
      %p295 = scmp.eq.s32.totalorder %s49, 0
      %p296 = por %p294, %p295
      %s297 = ssub.s32 %s51, %s58
      %p298 = scmp.eq.s32.totalorder %s297, 0
      %s300 = sadd.s32 %s299, 1
      %s301 = scalar_select %p298, %s299, %s300
      %p304 = pneg %p298
      %p305 = scmp.eq.s32.totalorder %s43, 3
      %p306 = por %p304, %p305
      %p307 = scmp.ne.s32.totalorder %s299, %s302
      %p308 = scmp.eq.s32.totalorder %s43, 0
      %p309 = por %p307, %p308
      %p310 = scmp.ne.s32.totalorder %s299, %s302
      %p311 = scmp.eq.s32.totalorder %s48, 3
      %p312 = por %p310, %p311
      %p313 = scmp.ne.s32.totalorder %s302, %s303
      %p314 = scmp.eq.s32.totalorder %s48, 0
      %p315 = por %p313, %p314
      %p316 = scmp.ne.s32.totalorder %s302, %s303
      %p317 = scmp.eq.s32.totalorder %s49, 3
      %p318 = por %p316, %p317
      %p320 = scmp.ne.s32.totalorder %s303, %s319
      %p321 = scmp.eq.s32.totalorder %s49, 0
      %p322 = por %p320, %p321
      %s323 = ssub.s32 %s51, %s58
      %p324 = scmp.eq.s32.totalorder %s323, 0
      %s326 = sadd.s32 %s325, 1
      %s327 = scalar_select %p324, %s325, %s326
      %p330 = pneg %p324
      %p331 = scmp.eq.s32.totalorder %s43, 3
      %p332 = por %p330, %p331
      %p333 = scmp.ne.s32.totalorder %s325, %s328
      %p334 = scmp.eq.s32.totalorder %s43, 0
      %p335 = por %p333, %p334
      %p336 = scmp.ne.s32.totalorder %s325, %s328
      %p337 = scmp.eq.s32.totalorder %s48, 3
      %p338 = por %p336, %p337
      %p339 = scmp.ne.s32.totalorder %s328, %s329
      %p340 = scmp.eq.s32.totalorder %s48, 0
      %p341 = por %p339, %p340
      %p342 = scmp.ne.s32.totalorder %s328, %s329
      %p343 = scmp.eq.s32.totalorder %s49, 3
      %p344 = por %p342, %p343
      %p346 = scmp.ne.s32.totalorder %s329, %s345
      %p347 = scmp.eq.s32.totalorder %s49, 0
      %p348 = por %p346, %p347
      %s349 = ssub.s32 %s51, %s58
      %p350 = scmp.eq.s32.totalorder %s349, 0
      %s352 = sadd.s32 %s351, 1
      %s353 = scalar_select %p350, %s351, %s352
      %p356 = pneg %p350
      %p357 = scmp.eq.s32.totalorder %s43, 3
      %p358 = por %p356, %p357
      %p359 = scmp.ne.s32.totalorder %s351, %s354
      %p360 = scmp.eq.s32.totalorder %s43, 0
      %p361 = por %p359, %p360
      %p362 = scmp.ne.s32.totalorder %s351, %s354
      %p363 = scmp.eq.s32.totalorder %s48, 3
      %p364 = por %p362, %p363
      %p365 = scmp.ne.s32.totalorder %s354, %s355
      %p366 = scmp.eq.s32.totalorder %s48, 0
      %p367 = por %p365, %p366
      %p368 = scmp.ne.s32.totalorder %s354, %s355
      %p369 = scmp.eq.s32.totalorder %s49, 3
      %p370 = por %p368, %p369
      %p372 = scmp.ne.s32.totalorder %s355, %s371
      %p373 = scmp.eq.s32.totalorder %s49, 0
      %p374 = por %p372, %p373
      %s375 = ssub.s32 %s51, %s58
      %p376 = scmp.eq.s32.totalorder %s375, 0
      %s378 = sadd.s32 %s377, 1
      %s379 = scalar_select %p376, %s377, %s378
      %p382 = pneg %p376
      %p383 = scmp.eq.s32.totalorder %s43, 3
      %p384 = por %p382, %p383
      %p385 = scmp.ne.s32.totalorder %s377, %s380
      %p386 = scmp.eq.s32.totalorder %s43, 0
      %p387 = por %p385, %p386
      %p388 = scmp.ne.s32.totalorder %s377, %s380
      %p389 = scmp.eq.s32.totalorder %s48, 3
      %p390 = por %p388, %p389
      %p391 = scmp.ne.s32.totalorder %s380, %s381
      %p392 = scmp.eq.s32.totalorder %s48, 0
      %p393 = por %p391, %p392
      %p394 = scmp.ne.s32.totalorder %s380, %s381
      %p395 = scmp.eq.s32.totalorder %s49, 3
      %p396 = por %p394, %p395
      %p398 = scmp.ne.s32.totalorder %s381, %s397
      %p399 = scmp.eq.s32.totalorder %s49, 0
      %p400 = por %p398, %p399
      %s401 = ssub.s32 %s51, %s58
      %p402 = scmp.eq.s32.totalorder %s401, 0
      %s404 = sadd.s32 %s403, 1
      %s405 = scalar_select %p402, %s403, %s404
      %p408 = pneg %p402
      %p409 = scmp.eq.s32.totalorder %s43, 3
      %p410 = por %p408, %p409
      %p411 = scmp.ne.s32.totalorder %s403, %s406
      %p412 = scmp.eq.s32.totalorder %s43, 0
      %p413 = por %p411, %p412
      %p414 = scmp.ne.s32.totalorder %s403, %s406
      %p415 = scmp.eq.s32.totalorder %s48, 3
      %p416 = por %p414, %p415
      %p417 = scmp.ne.s32.totalorder %s406, %s407
      %p418 = scmp.eq.s32.totalorder %s48, 0
      %p419 = por %p417, %p418
      %p420 = scmp.ne.s32.totalorder %s406, %s407
      %p421 = scmp.eq.s32.totalorder %s49, 3
      %p422 = por %p420, %p421
      %p424 = scmp.ne.s32.totalorder %s407, %s423
      %p425 = scmp.eq.s32.totalorder %s49, 0
      %p426 = por %p424, %p425
      %s427 = ssub.s32 %s51, %s58
      %p428 = scmp.eq.s32.totalorder %s427, 0
      %s430 = sadd.s32 %s429, 1
      %s431 = scalar_select %p428, %s429, %s430
      %p434 = pneg %p428
      %p435 = scmp.eq.s32.totalorder %s43, 3
      %p436 = por %p434, %p435
      %p437 = scmp.ne.s32.totalorder %s429, %s432
      %p438 = scmp.eq.s32.totalorder %s43, 0
      %p439 = por %p437, %p438
      %p440 = scmp.ne.s32.totalorder %s429, %s432
      %p441 = scmp.eq.s32.totalorder %s48, 3
      %p442 = por %p440, %p441
      %p443 = scmp.ne.s32.totalorder %s432, %s433
      %p444 = scmp.eq.s32.totalorder %s48, 0
      %p445 = por %p443, %p444
      %p446 = scmp.ne.s32.totalorder %s432, %s433
      %p447 = scmp.eq.s32.totalorder %s49, 3
      %p448 = por %p446, %p447
      %p450 = scmp.ne.s32.totalorder %s433, %s449
      %p451 = scmp.eq.s32.totalorder %s49, 0
      %p452 = por %p450, %p451
      %s453 = ssub.s32 %s51, %s58
      %p454 = scmp.eq.s32.totalorder %s453, 0
      %s456 = sadd.s32 %s455, 1
      %s457 = scalar_select %p454, %s455, %s456
      %p460 = pneg %p454
      %p461 = scmp.eq.s32.totalorder %s43, 3
      %p462 = por %p460, %p461
      %p463 = scmp.ne.s32.totalorder %s455, %s458
      %p464 = scmp.eq.s32.totalorder %s43, 0
      %p465 = por %p463, %p464
      %p466 = scmp.ne.s32.totalorder %s455, %s458
      %p467 = scmp.eq.s32.totalorder %s48, 3
      %p468 = por %p466, %p467
      %p469 = scmp.ne.s32.totalorder %s458, %s459
      %p470 = scmp.eq.s32.totalorder %s48, 0
      %p471 = por %p469, %p470
      %p472 = scmp.ne.s32.totalorder %s458, %s459
      %p473 = scmp.eq.s32.totalorder %s49, 3
      %p474 = por %p472, %p473
      %p476 = scmp.ne.s32.totalorder %s459, %s475
      %p477 = scmp.eq.s32.totalorder %s49, 0
      %p478 = por %p476, %p477
      %s479 = ssub.s32 %s51, %s58
      %p480 = scmp.eq.s32.totalorder %s479, 0
      %s482 = sadd.s32 %s481, 1
      %s483 = scalar_select %p480, %s481, %s482
      %p486 = pneg %p480
      %p487 = scmp.eq.s32.totalorder %s43, 3
      %p488 = por %p486, %p487
      %p489 = scmp.ne.s32.totalorder %s481, %s484
      %p490 = scmp.eq.s32.totalorder %s43, 0
      %p491 = por %p489, %p490
      %p492 = scmp.ne.s32.totalorder %s481, %s484
      %p493 = scmp.eq.s32.totalorder %s48, 3
      %p494 = por %p492, %p493
      %p495 = scmp.ne.s32.totalorder %s484, %s485
      %p496 = scmp.eq.s32.totalorder %s48, 0
      %p497 = por %p495, %p496
      %p498 = scmp.ne.s32.totalorder %s484, %s485
      %p499 = scmp.eq.s32.totalorder %s49, 3
      %p500 = por %p498, %p499
      %p502 = scmp.ne.s32.totalorder %s485, %s501
      %p503 = scmp.eq.s32.totalorder %s49, 0
      %p504 = por %p502, %p503
      %s505 = ssub.s32 %s51, %s58
      %p506 = scmp.eq.s32.totalorder %s505, 0
      %s508 = sadd.s32 %s507, 1
      %s509 = scalar_select %p506, %s507, %s508
      %p512 = pneg %p506
      %p513 = scmp.eq.s32.totalorder %s43, 3
      %p514 = por %p512, %p513
      %p515 = scmp.ne.s32.totalorder %s507, %s510
      %p516 = scmp.eq.s32.totalorder %s43, 0
      %p517 = por %p515, %p516
      %p518 = scmp.ne.s32.totalorder %s507, %s510
      %p519 = scmp.eq.s32.totalorder %s48, 3
      %p520 = por %p518, %p519
      %p521 = scmp.ne.s32.totalorder %s510, %s511
      %p522 = scmp.eq.s32.totalorder %s48, 0
      %p523 = por %p521, %p522
      %p524 = scmp.ne.s32.totalorder %s510, %s511
      %p525 = scmp.eq.s32.totalorder %s49, 3
      %p526 = por %p524, %p525
      %p528 = scmp.ne.s32.totalorder %s511, %s527
      %p529 = scmp.eq.s32.totalorder %s49, 0
      %p530 = por %p528, %p529
      %s532 = sadd.s32 %s531, 1
      %p535 = scmp.eq.s32.totalorder %s43, 3
      %p536 = scmp.ne.s32.totalorder %s531, %s533
      %p537 = scmp.eq.s32.totalorder %s43, 0
      %p538 = por %p536, %p537
      %p539 = scmp.ne.s32.totalorder %s531, %s533
      %p540 = scmp.eq.s32.totalorder %s48, 3
      %p541 = por %p539, %p540
      %p542 = scmp.ne.s32.totalorder %s533, %s534
      %p543 = scmp.eq.s32.totalorder %s48, 0
      %p544 = por %p542, %p543
      %p545 = scmp.ne.s32.totalorder %s533, %s534
      %p546 = scmp.eq.s32.totalorder %s49, 3
      %p547 = por %p545, %p546
      %p549 = scmp.ne.s32.totalorder %s534, %s548
      %p550 = scmp.eq.s32.totalorder %s49, 0
      %p551 = por %p549, %p550
      %s553 = sadd.s32 %s552, 1
      %p556 = scmp.eq.s32.totalorder %s43, 3
      %p557 = scmp.ne.s32.totalorder %s552, %s554
      %p558 = scmp.eq.s32.totalorder %s43, 0
      %p559 = por %p557, %p558
      %p560 = scmp.ne.s32.totalorder %s552, %s554
      %p561 = scmp.eq.s32.totalorder %s48, 3
      %p562 = por %p560, %p561
      %p563 = scmp.ne.s32.totalorder %s554, %s555
      %p564 = scmp.eq.s32.totalorder %s48, 0
      %p565 = por %p563, %p564
      %p566 = scmp.ne.s32.totalorder %s554, %s555
      %p567 = scmp.eq.s32.totalorder %s49, 3
      %p568 = por %p566, %p567
      %p570 = scmp.ne.s32.totalorder %s555, %s569
      %p571 = scmp.eq.s32.totalorder %s49, 0
      %p572 = por %p570, %p571
      %s573 = ssub.s32 %s51, %s58
      %s574 = ssub.s32 %s50, %s62
      %s575 = sor.u32 %s573, %s574
      %p576 = scmp.eq.s32.totalorder %s575, 0
      %s578 = sadd.s32 %s577, 1
      %s579 = scalar_select %p576, %s577, %s578
      %p582 = pneg %p576
      %p583 = scmp.eq.s32.totalorder %s43, 3
      %p584 = por %p582, %p583
      %p585 = scmp.ne.s32.totalorder %s577, %s580
      %p586 = scmp.eq.s32.totalorder %s43, 0
      %p587 = por %p585, %p586
      %p588 = scmp.ne.s32.totalorder %s577, %s580
      %p589 = scmp.eq.s32.totalorder %s48, 3
      %p590 = por %p588, %p589
      %p591 = scmp.ne.s32.totalorder %s580, %s581
      %p592 = scmp.eq.s32.totalorder %s48, 0
      %p593 = por %p591, %p592
      %p594 = scmp.ne.s32.totalorder %s580, %s581
      %p595 = scmp.eq.s32.totalorder %s49, 3
      %p596 = por %p594, %p595
      %p598 = scmp.ne.s32.totalorder %s581, %s597
      %p599 = scmp.eq.s32.totalorder %s49, 0
      %p600 = por %p598, %p599
      %s601 = ssub.s32 %s50, %s62
      %p602 = scmp.eq.s32.totalorder %s601, 0
      %s604 = sadd.s32 %s603, 1
      %s605 = scalar_select %p602, %s603, %s604
      %p608 = pneg %p602
      %p609 = scmp.eq.s32.totalorder %s43, 3
      %p610 = por %p608, %p609
      %p611 = scmp.ne.s32.totalorder %s603, %s606
      %p612 = scmp.eq.s32.totalorder %s43, 0
      %p613 = por %p611, %p612
      %p614 = scmp.ne.s32.totalorder %s603, %s606
      %p615 = scmp.eq.s32.totalorder %s48, 3
      %p616 = por %p614, %p615
      %p617 = scmp.ne.s32.totalorder %s606, %s607
      %p618 = scmp.eq.s32.totalorder %s48, 0
      %p619 = por %p617, %p618
      %p620 = scmp.ne.s32.totalorder %s606, %s607
      %p621 = scmp.eq.s32.totalorder %s49, 3
      %p622 = por %p620, %p621
      %p624 = scmp.ne.s32.totalorder %s607, %s623
      %p625 = scmp.eq.s32.totalorder %s49, 0
      %p626 = por %p624, %p625
      %p627 = scmp.le.s32.totalorder 1, %s43
      %p628 = scmp.lt.s32.totalorder %s43, 5
      %p629 = pnand %p627, %p628
      %p630 = pneg %p629
      // Predicated region
      $region9: #{tpu_custom_call.1} parent=5 // pred_check
        _
      $region10: #{tpu_custom_call.1} parent=5 // pred_check_branch
        %632 = sbr.rel (%p629) target = $region12
      $region11: #{tpu_custom_call.1} parent=5 // pred_region
        %s633 = ssub.s32 %s43, 1
        // Predicated region
        $region13: #{tpu_custom_call.1} parent=11 // pred_check
          %p634 = pneg %p544
        $region14: #{tpu_custom_call.1} parent=11 // pred_check_branch
          %636 = sbr.rel (%p634) target = $region16
        $region15: #{tpu_custom_call.1} parent=11 // pred_region
          _
        $region16: #{tpu_custom_call.1} parent=11 // pred_fallthru
          _
        // Predicated region
        $region17: #{tpu_custom_call.1} parent=11 // pred_check
          %p637 = pneg %p565
        $region18: #{tpu_custom_call.1} parent=11 // pred_check_branch
          %639 = sbr.rel (%p637) target = $region20
        $region19: #{tpu_custom_call.1} parent=11 // pred_region
          _
        $region20: #{tpu_custom_call.1} parent=11 // pred_fallthru
          _
      $region12: #{tpu_custom_call.1} parent=5 // pred_fallthru
        _
      %p640 = scmp.lt.s32.totalorder %s43, 4
      // Predicated region
      $region21: #{tpu_custom_call.1} parent=5 // pred_check
        %p641 = pneg %p640
      $region22: #{tpu_custom_call.1} parent=5 // pred_check_branch
        %643 = sbr.rel (%p641) target = $region24
      $region23: #{tpu_custom_call.1} parent=5 // pred_region
        // Predicated region
        $region25: #{tpu_custom_call.1} parent=23 // pred_check
          %p644 = pneg %p75
        $region26: #{tpu_custom_call.1} parent=23 // pred_check_branch
          %646 = sbr.rel (%p644) target = $region28
        $region27: #{tpu_custom_call.1} parent=23 // pred_region
          %s647 = sand.u32 %s65, 1
          %s648 = scalar_lea.sflag [#allocation5], %s647
          %s649 = sand.u32 %s65, 1
          %s650 = smul.addr %s649, 4
          %s651 = scalar_lea.vmem [#allocation4], %s650
          %653 = vsyncadd %s648, 0
          %s654 = smul.addr %s50, 4
          %s655 = scalar_lea.hbm %s0, %s654
          %s657 = sshll.u32 %s655, 4
          %s658 = int_to_ptr.hbm [resolvable:$true] %s657
          %s659 = sshll.u32 %s651, 4
          %s660 = int_to_ptr.vmem [resolvable:$true] %s659
          %662 = dma.hbm_to_vmem [thread:$0]  %s658, 64, %s660, %s648
        $region28: #{tpu_custom_call.1} parent=23 // pred_fallthru
          _
        // Predicated region
        $region29: #{tpu_custom_call.1} parent=23 // pred_check
          %p663 = pneg %p101
        $region30: #{tpu_custom_call.1} parent=23 // pred_check_branch
          %665 = sbr.rel (%p663) target = $region32
        $region31: #{tpu_custom_call.1} parent=23 // pred_region
          %s666 = sand.u32 %s43, 1
          %s667 = scalar_lea.sflag [#allocation8], %s666
          %s668 = sand.u32 %s91, 1
          %s669 = scalar_lea.vmem [#allocation7], %s668
          %671 = vsyncadd %s667, 0
          %s672 = scalar_lea.hbm %s1, %s50
          %s674 = sshll.u32 %s672, 4
          %s675 = int_to_ptr.hbm [resolvable:$true] %s674
          %s676 = sshll.u32 %s669, 4
          %s677 = int_to_ptr.vmem [resolvable:$true] %s676
          %679 = dma.hbm_to_vmem [thread:$0]  %s675, 16, %s677, %s667
        $region32: #{tpu_custom_call.1} parent=23 // pred_fallthru
          _
        // Predicated region
        $region33: #{tpu_custom_call.1} parent=23 // pred_check
          %p680 = pneg %p127
        $region34: #{tpu_custom_call.1} parent=23 // pred_check_branch
          %682 = sbr.rel (%p680) target = $region36
        $region35: #{tpu_custom_call.1} parent=23 // pred_region
          %s683 = sand.u32 %s43, 1
          %s684 = scalar_lea.sflag [#allocation8], %s683
          %s685 = sand.u32 %s117, 1
          %s686 = scalar_lea.vmem [#allocation9], %s685
          %688 = vsyncadd %s684, 0
          %s689 = scalar_lea.hbm %s2, %s51
          %s691 = sshll.u32 %s689, 4
          %s692 = int_to_ptr.hbm [resolvable:$true] %s691
          %s693 = sshll.u32 %s686, 4
          %s694 = int_to_ptr.vmem [resolvable:$true] %s693
          %696 = dma.hbm_to_vmem [thread:$0]  %s692, 16, %s694, %s684
        $region36: #{tpu_custom_call.1} parent=23 // pred_fallthru
          _
        // Predicated region
        $region37: #{tpu_custom_call.1} parent=23 // pred_check
          %p697 = pneg %p153
        $region38: #{tpu_custom_call.1} parent=23 // pred_check_branch
          %699 = sbr.rel (%p697) target = $region40
        $region39: #{tpu_custom_call.1} parent=23 // pred_region
          %s700 = sand.u32 %s43, 1
          %s701 = scalar_lea.sflag [#allocation11], %s700
          %s702 = sand.u32 %s143, 1
          %s703 = scalar_lea.vmem [#allocation10], %s702
          %705 = vsyncadd %s701, 0
          %s706 = scalar_lea.hbm %s3, %s51
          %s708 = sshll.u32 %s706, 4
          %s709 = int_to_ptr.hbm [resolvable:$true] %s708
          %s710 = sshll.u32 %s703, 4
          %s711 = int_to_ptr.vmem [resolvable:$true] %s710
          %713 = dma.hbm_to_vmem [thread:$0]  %s709, 16, %s711, %s701
        $region40: #{tpu_custom_call.1} parent=23 // pred_fallthru
          _
        // Predicated region
        $region41: #{tpu_custom_call.1} parent=23 // pred_check
          %p714 = pneg %p179
        $region42: #{tpu_custom_call.1} parent=23 // pred_check_branch
          %716 = sbr.rel (%p714) target = $region44
        $region43: #{tpu_custom_call.1} parent=23 // pred_region
          %p717 = scmp.lt.s32.totalorder %s51, 1
          %s718 = scalar_select %p717, %s51, 1
          %s719 = smul.addr %s718, 4
          %s720 = smul.addr %s719, 4
          %s721 = scalar_lea.vmem %s4, %s720
        $region44: #{tpu_custom_call.1} parent=23 // pred_fallthru
          _
        // Predicated region
        $region45: #{tpu_custom_call.1} parent=23 // pred_check
          %p722 = pneg %p205
        $region46: #{tpu_custom_call.1} parent=23 // pred_check_branch
          %724 = sbr.rel (%p722) target = $region48
        $region47: #{tpu_custom_call.1} parent=23 // pred_region
          %p725 = scmp.lt.s32.totalorder %s51, 1
          %s726 = scalar_select %p725, %s51, 1
          %s727 = scalar_lea.vmem %s5, %s726
        $region48: #{tpu_custom_call.1} parent=23 // pred_fallthru
          _
        // Predicated region
        $region49: #{tpu_custom_call.1} parent=23 // pred_check
          %p728 = pneg %p231
        $region50: #{tpu_custom_call.1} parent=23 // pred_check_branch
          %730 = sbr.rel (%p728) target = $region52
        $region51: #{tpu_custom_call.1} parent=23 // pred_region
          %p731 = scmp.lt.s32.totalorder %s51, 1
          %s732 = scalar_select %p731, %s51, 1
          %s733 = smul.addr %s732, 4
          %s734 = smul.addr %s733, 4
          %s735 = scalar_lea.vmem %s6, %s734
        $region52: #{tpu_custom_call.1} parent=23 // pred_fallthru
          _
        // Predicated region
        $region53: #{tpu_custom_call.1} parent=23 // pred_check
          %p736 = pneg %p257
        $region54: #{tpu_custom_call.1} parent=23 // pred_check_branch
          %738 = sbr.rel (%p736) target = $region56
        $region55: #{tpu_custom_call.1} parent=23 // pred_region
          %p739 = scmp.lt.s32.totalorder %s51, 1
          %s740 = scalar_select %p739, %s51, 1
          %s741 = scalar_lea.vmem %s7, %s740
        $region56: #{tpu_custom_call.1} parent=23 // pred_fallthru
          _
        // Predicated region
        $region57: #{tpu_custom_call.1} parent=23 // pred_check
          %p742 = pneg %p283
        $region58: #{tpu_custom_call.1} parent=23 // pred_check_branch
          %744 = sbr.rel (%p742) target = $region60
        $region59: #{tpu_custom_call.1} parent=23 // pred_region
          %p745 = scmp.lt.s32.totalorder %s51, 1
          %s746 = scalar_select %p745, %s51, 1
          %s747 = smul.addr %s746, 4
          %s748 = smul.addr %s747, 4
          %s749 = scalar_lea.vmem %s8, %s748
        $region60: #{tpu_custom_call.1} parent=23 // pred_fallthru
          _
        // Predicated region
        $region61: #{tpu_custom_call.1} parent=23 // pred_check
          %p750 = pneg %p309
        $region62: #{tpu_custom_call.1} parent=23 // pred_check_branch
          %752 = sbr.rel (%p750) target = $region64
        $region63: #{tpu_custom_call.1} parent=23 // pred_region
          %p753 = scmp.lt.s32.totalorder %s51, 1
          %s754 = scalar_select %p753, %s51, 1
          %s755 = scalar_lea.vmem %s9, %s754
        $region64: #{tpu_custom_call.1} parent=23 // pred_fallthru
          _
        // Predicated region
        $region65: #{tpu_custom_call.1} parent=23 // pred_check
          %p756 = pneg %p335
        $region66: #{tpu_custom_call.1} parent=23 // pred_check_branch
          %758 = sbr.rel (%p756) target = $region68
        $region67: #{tpu_custom_call.1} parent=23 // pred_region
          %p759 = scmp.lt.s32.totalorder %s51, 1
          %s760 = scalar_select %p759, %s51, 1
          %s761 = smul.addr %s760, 4
          %s762 = smul.addr %s761, 4
          %s763 = scalar_lea.vmem %s10, %s762
        $region68: #{tpu_custom_call.1} parent=23 // pred_fallthru
          _
        // Predicated region
        $region69: #{tpu_custom_call.1} parent=23 // pred_check
          %p764 = pneg %p361
        $region70: #{tpu_custom_call.1} parent=23 // pred_check_branch
          %766 = sbr.rel (%p764) target = $region72
        $region71: #{tpu_custom_call.1} parent=23 // pred_region
          %p767 = scmp.lt.s32.totalorder %s51, 1
          %s768 = scalar_select %p767, %s51, 1
          %s769 = scalar_lea.vmem %s11, %s768
        $region72: #{tpu_custom_call.1} parent=23 // pred_fallthru
          _
        // Predicated region
        $region73: #{tpu_custom_call.1} parent=23 // pred_check
          %p770 = pneg %p387
        $region74: #{tpu_custom_call.1} parent=23 // pred_check_branch
          %772 = sbr.rel (%p770) target = $region76
        $region75: #{tpu_custom_call.1} parent=23 // pred_region
          %p773 = scmp.lt.s32.totalorder %s51, 1
          %s774 = scalar_select %p773, %s51, 1
          %s775 = scalar_lea.vmem %s12, %s774
        $region76: #{tpu_custom_call.1} parent=23 // pred_fallthru
          _
        // Predicated region
        $region77: #{tpu_custom_call.1} parent=23 // pred_check
          %p776 = pneg %p413
        $region78: #{tpu_custom_call.1} parent=23 // pred_check_branch
          %778 = sbr.rel (%p776) target = $region80
        $region79: #{tpu_custom_call.1} parent=23 // pred_region
          %s779 = sand.u32 %s43, 1
          %s780 = scalar_lea.sflag [#allocation11], %s779
          %s781 = sand.u32 %s403, 1
          %s782 = scalar_lea.vmem [#allocation12], %s781
          %784 = vsyncadd %s780, 0
          %s785 = scalar_lea.hbm %s13, %s51
          %s787 = sshll.u32 %s785, 4
          %s788 = int_to_ptr.hbm [resolvable:$true] %s787
          %s789 = sshll.u32 %s782, 4
          %s790 = int_to_ptr.vmem [resolvable:$true] %s789
          %792 = dma.hbm_to_vmem [thread:$0]  %s788, 16, %s790, %s780
        $region80: #{tpu_custom_call.1} parent=23 // pred_fallthru
          _
        // Predicated region
        $region81: #{tpu_custom_call.1} parent=23 // pred_check
          %p793 = pneg %p439
        $region82: #{tpu_custom_call.1} parent=23 // pred_check_branch
          %795 = sbr.rel (%p793) target = $region84
        $region83: #{tpu_custom_call.1} parent=23 // pred_region
          %p796 = scmp.lt.s32.totalorder %s51, 1
          %s797 = scalar_select %p796, %s51, 1
          %s798 = smul.addr %s797, 4
          %s799 = smul.addr %s798, 4
          %s800 = scalar_lea.vmem %s14, %s799
        $region84: #{tpu_custom_call.1} parent=23 // pred_fallthru
          _
        // Predicated region
        $region85: #{tpu_custom_call.1} parent=23 // pred_check
          %p801 = pneg %p465
        $region86: #{tpu_custom_call.1} parent=23 // pred_check_branch
          %803 = sbr.rel (%p801) target = $region88
        $region87: #{tpu_custom_call.1} parent=23 // pred_region
          %p804 = scmp.lt.s32.totalorder %s51, 1
          %s805 = scalar_select %p804, %s51, 1
          %s806 = scalar_lea.vmem %s15, %s805
        $region88: #{tpu_custom_call.1} parent=23 // pred_fallthru
          _
        // Predicated region
        $region89: #{tpu_custom_call.1} parent=23 // pred_check
          %p807 = pneg %p491
        $region90: #{tpu_custom_call.1} parent=23 // pred_check_branch
          %809 = sbr.rel (%p807) target = $region92
        $region91: #{tpu_custom_call.1} parent=23 // pred_region
          %p810 = scmp.lt.s32.totalorder %s51, 1
          %s811 = scalar_select %p810, %s51, 1
          %s812 = smul.addr %s811, 16
          %s813 = smul.addr %s812, 4
          %s814 = scalar_lea.vmem %s16, %s813
        $region92: #{tpu_custom_call.1} parent=23 // pred_fallthru
          _
        // Predicated region
        $region93: #{tpu_custom_call.1} parent=23 // pred_check
          %p815 = pneg %p517
        $region94: #{tpu_custom_call.1} parent=23 // pred_check_branch
          %817 = sbr.rel (%p815) target = $region96
        $region95: #{tpu_custom_call.1} parent=23 // pred_region
          %p818 = scmp.lt.s32.totalorder %s51, 1
          %s819 = scalar_select %p818, %s51, 1
          %s820 = scalar_lea.vmem %s17, %s819
        $region96: #{tpu_custom_call.1} parent=23 // pred_fallthru
          _
      $region24: #{tpu_custom_call.1} parent=5 // pred_fallthru
        _
      %p821 = scmp.le.s32.totalorder 1, %s43
      %p822 = scmp.lt.s32.totalorder %s43, 5
      %p823 = pnand %p821, %p822
      %p824 = pneg %p823
      // Predicated region
      $region97: #{tpu_custom_call.1} parent=5 // pred_check
        _
      $region98: #{tpu_custom_call.1} parent=5 // pred_check_branch
        %826 = sbr.rel (%p823) target = $region100
      $region99: #{tpu_custom_call.1} parent=5 // pred_region
        %s827 = ssub.s32 %s43, 1
        %s828 = sand.u32 %s68, 1
        %s829 = scalar_lea.sflag [#allocation5], %s828
        %s830 = sand.u32 %s68, 1
        %s831 = smul.addr %s830, 4
        %s832 = scalar_lea.vmem [#allocation4], %s831
        // Predicated region
        $region101: #{tpu_custom_call.1} parent=99 // pred_check
          %p833 = pneg %p81
        $region102: #{tpu_custom_call.1} parent=99 // pred_check_branch
          %835 = sbr.rel (%p833) target = $region104
        $region103: #{tpu_custom_call.1} parent=99 // pred_region
          %837 = dma.done %s829, 64
        $region104: #{tpu_custom_call.1} parent=99 // pred_fallthru
          _
        %s838 = sand.u32 %s48, 1
        %s839 = scalar_lea.sflag [#allocation8], %s838
        %s840 = sand.u32 %s94, 1
        %s841 = scalar_lea.vmem [#allocation7], %s840
        // Predicated region
        $region105: #{tpu_custom_call.1} parent=99 // pred_check
          %p842 = pneg %p107
        $region106: #{tpu_custom_call.1} parent=99 // pred_check_branch
          %844 = sbr.rel (%p842) target = $region108
        $region107: #{tpu_custom_call.1} parent=99 // pred_region
          %846 = dma.done %s839, 16
        $region108: #{tpu_custom_call.1} parent=99 // pred_fallthru
          _
        %s847 = sand.u32 %s48, 1
        %s848 = scalar_lea.sflag [#allocation8], %s847
        %s849 = sand.u32 %s120, 1
        %s850 = scalar_lea.vmem [#allocation9], %s849
        // Predicated region
        $region109: #{tpu_custom_call.1} parent=99 // pred_check
          %p851 = pneg %p133
        $region110: #{tpu_custom_call.1} parent=99 // pred_check_branch
          %853 = sbr.rel (%p851) target = $region112
        $region111: #{tpu_custom_call.1} parent=99 // pred_region
          %855 = dma.done %s848, 16
        $region112: #{tpu_custom_call.1} parent=99 // pred_fallthru
          _
        %s856 = sand.u32 %s48, 1
        %s857 = scalar_lea.sflag [#allocation11], %s856
        %s858 = sand.u32 %s146, 1
        %s859 = scalar_lea.vmem [#allocation10], %s858
        // Predicated region
        $region113: #{tpu_custom_call.1} parent=99 // pred_check
          %p860 = pneg %p159
        $region114: #{tpu_custom_call.1} parent=99 // pred_check_branch
          %862 = sbr.rel (%p860) target = $region116
        $region115: #{tpu_custom_call.1} parent=99 // pred_region
          %864 = dma.done %s857, 16
        $region116: #{tpu_custom_call.1} parent=99 // pred_fallthru
          _
        %s865 = sand.u32 %s48, 1
        %s866 = scalar_lea.sflag [#allocation11], %s865
        %s867 = sand.u32 %s406, 1
        %s868 = scalar_lea.vmem [#allocation12], %s867
        // Predicated region
        $region117: #{tpu_custom_call.1} parent=99 // pred_check
          %p869 = pneg %p419
        $region118: #{tpu_custom_call.1} parent=99 // pred_check_branch
          %871 = sbr.rel (%p869) target = $region120
        $region119: #{tpu_custom_call.1} parent=99 // pred_region
          %873 = dma.done %s866, 16
        $region120: #{tpu_custom_call.1} parent=99 // pred_fallthru
          _
        %s874 = sand.u32 %s68, 1
        %s875 = scalar_lea.sflag [#allocation5], %s874
        %s876 = sand.u32 %s68, 1
        %s877 = smul.addr %s876, 4
        %s878 = scalar_lea.vmem [#allocation4], %s877
        %p879 = pneg %p81
        %p880 = pneg %p78
        %s881 = sand.u32 %s48, 1
        %s882 = scalar_lea.sflag [#allocation8], %s881
        %s883 = sand.u32 %s94, 1
        %s884 = scalar_lea.vmem [#allocation7], %s883
        %p885 = pneg %p107
        %p886 = pneg %p104
        %s887 = sand.u32 %s48, 1
        %s888 = scalar_lea.sflag [#allocation8], %s887
        %s889 = sand.u32 %s120, 1
        %s890 = scalar_lea.vmem [#allocation9], %s889
        %p891 = pneg %p133
        %p892 = pneg %p130
        %s893 = sand.u32 %s48, 1
        %s894 = scalar_lea.sflag [#allocation11], %s893
        %s895 = sand.u32 %s146, 1
        %s896 = scalar_lea.vmem [#allocation10], %s895
        %p897 = pneg %p159
        %p898 = pneg %p156
        %p899 = scmp.lt.s32.totalorder %s53, 1
        %s900 = scalar_select %p899, %s53, 1
        %s901 = smul.addr %s900, 4
        %s902 = smul.addr %s901, 4
        %s903 = scalar_lea.vmem %s4, %s902
        %p904 = pneg %p185
        %p905 = pneg %p182
        %p906 = scmp.lt.s32.totalorder %s53, 1
        %s907 = scalar_select %p906, %s53, 1
        %s908 = scalar_lea.vmem %s5, %s907
        %p909 = pneg %p211
        %p910 = pneg %p208
        %p911 = scmp.lt.s32.totalorder %s53, 1
        %s912 = scalar_select %p911, %s53, 1
        %s913 = smul.addr %s912, 4
        %s914 = smul.addr %s913, 4
        %s915 = scalar_lea.vmem %s6, %s914
        %p916 = pneg %p237
        %p917 = pneg %p234
        %p918 = scmp.lt.s32.totalorder %s53, 1
        %s919 = scalar_select %p918, %s53, 1
        %s920 = scalar_lea.vmem %s7, %s919
        %p921 = pneg %p263
        %p922 = pneg %p260
        %p923 = scmp.lt.s32.totalorder %s53, 1
        %s924 = scalar_select %p923, %s53, 1
        %s925 = smul.addr %s924, 4
        %s926 = smul.addr %s925, 4
        %s927 = scalar_lea.vmem %s8, %s926
        %p928 = pneg %p289
        %p929 = pneg %p286
        %p930 = scmp.lt.s32.totalorder %s53, 1
        %s931 = scalar_select %p930, %s53, 1
        %s932 = scalar_lea.vmem %s9, %s931
        %p933 = pneg %p315
        %p934 = pneg %p312
        %p935 = scmp.lt.s32.totalorder %s53, 1
        %s936 = scalar_select %p935, %s53, 1
        %s937 = smul.addr %s936, 4
        %s938 = smul.addr %s937, 4
        %s939 = scalar_lea.vmem %s10, %s938
        %p940 = pneg %p341
        %p941 = pneg %p338
        %p942 = scmp.lt.s32.totalorder %s53, 1
        %s943 = scalar_select %p942, %s53, 1
        %s944 = scalar_lea.vmem %s11, %s943
        %p945 = pneg %p367
        %p946 = pneg %p364
        %p947 = scmp.lt.s32.totalorder %s53, 1
        %s948 = scalar_select %p947, %s53, 1
        %s949 = scalar_lea.vmem %s12, %s948
        %p950 = pneg %p393
        %p951 = pneg %p390
        %s952 = sand.u32 %s48, 1
        %s953 = scalar_lea.sflag [#allocation11], %s952
        %s954 = sand.u32 %s406, 1
        %s955 = scalar_lea.vmem [#allocation12], %s954
        %p956 = pneg %p419
        %p957 = pneg %p416
        %p958 = scmp.lt.s32.totalorder %s53, 1
        %s959 = scalar_select %p958, %s53, 1
        %s960 = smul.addr %s959, 4
        %s961 = smul.addr %s960, 4
        %s962 = scalar_lea.vmem %s14, %s961
        %p963 = pneg %p445
        %p964 = pneg %p442
        %p965 = scmp.lt.s32.totalorder %s53, 1
        %s966 = scalar_select %p965, %s53, 1
        %s967 = scalar_lea.vmem %s15, %s966
        %p968 = pneg %p471
        %p969 = pneg %p468
        %p970 = scmp.lt.s32.totalorder %s53, 1
        %s971 = scalar_select %p970, %s53, 1
        %s972 = smul.addr %s971, 16
        %s973 = smul.addr %s972, 4
        %s974 = scalar_lea.vmem %s16, %s973
        %p975 = pneg %p497
        %p976 = pneg %p494
        %p977 = scmp.lt.s32.totalorder %s53, 1
        %s978 = scalar_select %p977, %s53, 1
        %s979 = scalar_lea.vmem %s17, %s978
        %p980 = pneg %p523
        %p981 = pneg %p520
        %p982 = pneg %p544
        %p983 = pneg %p541
        %p984 = pneg %p565
        %p985 = pneg %p562
        %p986 = pneg %p593
        %p987 = pneg %p590
        %s988 = sand.u32 %s580, 1
        %s989 = scalar_lea.sflag [#allocation6], %s988
        %s990 = sand.u32 %s580, 1
        %s991 = smul.addr %s990, 4
        %s992 = scalar_lea.vmem [#allocation13], %s991
        %p993 = pneg %p619
        %p994 = pneg %p616
        %s995 = sand.u32 %s606, 1
        %s996 = scalar_lea.sflag [#allocation15], %s995
        %s997 = sand.u32 %s606, 1
        %s998 = smul.addr %s997, 8
        %s999 = scalar_lea.vmem [#allocation14], %s998
        %p1000 = scmp.lt.s32.totalorder %s53, 1
        %s1001 = scalar_select %p1000, %s53, 1
        %s1002 = smul.addr %s1001, 4
        %s1003 = smul.addr %s1002, 4
        %s1004 = scalar_lea.vmem %s4, %s1003
        %p1005 = scmp.lt.s32.totalorder %s53, 1
        %s1006 = scalar_select %p1005, %s53, 1
        %s1007 = scalar_lea.vmem %s5, %s1006
        %p1008 = scmp.lt.s32.totalorder %s53, 1
        %s1009 = scalar_select %p1008, %s53, 1
        %s1010 = smul.addr %s1009, 4
        %s1011 = smul.addr %s1010, 4
        %s1012 = scalar_lea.vmem %s6, %s1011
        %p1013 = scmp.lt.s32.totalorder %s53, 1
        %s1014 = scalar_select %p1013, %s53, 1
        %s1015 = scalar_lea.vmem %s7, %s1014
        %p1016 = scmp.lt.s32.totalorder %s53, 1
        %s1017 = scalar_select %p1016, %s53, 1
        %s1018 = smul.addr %s1017, 4
        %s1019 = smul.addr %s1018, 4
        %s1020 = scalar_lea.vmem %s8, %s1019
        %p1021 = scmp.lt.s32.totalorder %s53, 1
        %s1022 = scalar_select %p1021, %s53, 1
        %s1023 = scalar_lea.vmem %s9, %s1022
        %p1024 = scmp.lt.s32.totalorder %s53, 1
        %s1025 = scalar_select %p1024, %s53, 1
        %s1026 = smul.addr %s1025, 4
        %s1027 = smul.addr %s1026, 4
        %s1028 = scalar_lea.vmem %s10, %s1027
        %p1029 = scmp.lt.s32.totalorder %s53, 1
        %s1030 = scalar_select %p1029, %s53, 1
        %s1031 = scalar_lea.vmem %s11, %s1030
        %p1032 = scmp.lt.s32.totalorder %s53, 1
        %s1033 = scalar_select %p1032, %s53, 1
        %s1034 = scalar_lea.vmem %s12, %s1033
        %p1035 = scmp.lt.s32.totalorder %s53, 1
        %s1036 = scalar_select %p1035, %s53, 1
        %s1037 = smul.addr %s1036, 4
        %s1038 = smul.addr %s1037, 4
        %s1039 = scalar_lea.vmem %s14, %s1038
        %p1040 = scmp.lt.s32.totalorder %s53, 1
        %s1041 = scalar_select %p1040, %s53, 1
        %s1042 = scalar_lea.vmem %s15, %s1041
        %p1043 = scmp.lt.s32.totalorder %s53, 1
        %s1044 = scalar_select %p1043, %s53, 1
        %s1045 = smul.addr %s1044, 16
        %s1046 = smul.addr %s1045, 4
        %s1047 = scalar_lea.vmem %s16, %s1046
        %p1048 = scmp.lt.s32.totalorder %s53, 1
        %s1049 = scalar_select %p1048, %s53, 1
        %s1050 = scalar_lea.vmem %s17, %s1049
        %p1052 = scmp.eq.s32.totalorder %s53, 0
        // Predicated region
        $region121: #{tpu_custom_call.1} parent=99 // pred_check
          %p1053 = pneg %p1052
        $region122: #{tpu_custom_call.1} parent=99 // pred_check_branch
          %1055 = sbr.rel (%p1053) target = $region124
        $region123: #{tpu_custom_call.1} parent=99 // pred_region
          %v1056 = vld [vmem:[%s832] sm:$0xf]
          %v1057 = vunpack.c.l.bf16 %v1056
          %vm1058 = vcmask 261120
          %1059 = vst.msk [vmem:[#allocation2] sm:$0xff] %vm1058, %v1057
          %v1060 = vlaneseq
          %v1061 = vshrl.u32 %v1060, 7
          %v1062 = vlaneseq
          %v1063 = vand.u32 %v1062, 127
          %vm1064 = vcmp.le.s32.totalorder %v1063, %v1061
          %v1065 = vld [vmem:[%s841] sm:$0x1]
          %vm1066 = vcmp.gt.f32.partialorder %v1065, 0.5
          %v1067 = vsel %vm1066, 1, 0
          %v1068 = vperm.slane %v1067, 0
          %vm1069 = vcmp.eq.s32.totalorder %v1068, 1
          %vm1070 = vmand %vm1064, %vm1069
          %v1071 = vsel %vm1070, 0.0, -1e+09
          %vm1072 = vcmask 64512
          %1073 = vst.msk [vmem:[#allocation3] sm:$0xff] %vm1072, %v1071
        $region124: #{tpu_custom_call.1} parent=99 // pred_fallthru
          _
        %v1074 = vld [vmem:[#allocation2] sm:$0xff]
        %v1075 = vld [vmem:[#allocation3] sm:$0xff]
        %v1076 = vld [vmem:[%s850] sm:$0x1]
        %v1077 = vld [vmem:[%s859] sm:$0x1]
        %vm1078 = vcmask 261120
        %v1079 = vsel %vm1078, %v1074, 0.0
        %1080 = vadd.xlane.f32.xlu0 %v1079
        %v1081 = vpop.xlane.xlu0 %1080
        %v1082 = vrcp.pop 32.0
        %v1083 = vmul.f32 32.0, %v1082
        %v1084 = vsub.f32 1.0, %v1083
        %v1085 = vmul.f32 %v1082, %v1084
        %v1086 = vadd.f32 %v1082, %v1085
        %vm1087 = vweird.f32 %v1082
        %v1088 = vsel %vm1087, %v1082, %v1086
        %v1089 = vmul.f32 %v1081, %v1088
        %v1090 = vsub.f32 %v1074, %v1089
        %v1091 = vmul.f32 %v1090, %v1090
        %v1092 = vsel %vm1078, %v1091, 0.0
        %1093 = vadd.xlane.f32.xlu0 %v1092
        %v1094 = vpop.xlane.xlu0 %1093
        %v1095 = vmul.f32 %v1094, %v1088
        %v1096 = vadd.f32 %v1095, 1e-05
        %v1097 = vrsqrt.pop %v1096
        %v1098 = vmul.f32 %v1097, %v1096
        %v1099 = vmul.f32 %v1098, %v1097
        %v1100 = vmul.f32 0.5, %v1099
        %v1101 = vsub.f32 1.5, %v1100
        %v1102 = vmul.f32 %v1097, %v1101
        %vm1103 = vweird.f32 %v1096
        %vm1104 = vweird.f32 %v1097
        %vm1105 = vmor %vm1103, %vm1104
        %v1106 = vsel %vm1105, %v1097, %v1102
        %v1107 = vmul.f32 %v1090, %v1106
        %v1109 = vperm.slane %v1076, 0
        %v1111 = vmul.f32 %v1107, %v1109
        %v1113 = vperm.slane %v1077, 0
        %v1115 = vadd.f32 %v1111, %v1113
        %v1116 = vpack.c.bf16 %v1115, %v1115
        %v1117 = vld [vmem:[%s1004] sm:$0xf]
        %v1118 = vld [vmem:[%s1004 + $0x4] sm:$0xf]
        %v1119 = vld [vmem:[%s1004 + $0x8] sm:$0xf]
        %v1120 = vld [vmem:[%s1004 + $0xc] sm:$0xf]
        %v1121 = vld [vmem:[%s1007] sm:$0x1]
        %v1123 = vperm.slane %v1121, 0
        %v1129 = vunpack.c.l.b16 %v1117
        %v1130 = vunpack.c.l.b16 %v1118
        %v1131 = vunpack.c.l.b16 %v1119
        %v1132 = vunpack.c.l.b16 %v1120
        %v1133 = vpack.c.b16 %v1130, %v1129
        %v1134 = vpack.c.b16 %v1132, %v1131
        %v1138 = vsel %vm1078, %v1116, 0
        %1140 = vmatpush.bf16.msra.mxu0 0
        %1141 = vmatpush.bf16.msra.mxu0 0
        %1142 = vmatpush.bf16.msra.mxu0 0
        %1143 = vmatpush.bf16.msra.mxu0 0
        %1144 = vmatpush.bf16.msra.mxu0 0
        %1145 = vmatpush.bf16.msra.mxu0 0
        %1146 = vmatpush.bf16.msra.mxu0 %v1134
        %1147 = vmatpush.bf16.msra.mxu0 %v1133
        %1148 = vmatmul.bf16.gmra.mxu0 %v1138
        %v1149 = vpop.f32.mrf.mxu0
        %v1150 = vadd.f32 %v1123, %v1149
        %v1151 = vpop.f32.mrf.mxu0
        %1152 = vdwg.mxu0
        %v1153 = vmul.f32 %v1150, 0.35355338
        %v1154 = vpack.c.bf16 %v1153, %v1153
        %v1155 = vld [vmem:[%s1012] sm:$0xf]
        %v1156 = vld [vmem:[%s1012 + $0x4] sm:$0xf]
        %v1157 = vld [vmem:[%s1012 + $0x8] sm:$0xf]
        %v1158 = vld [vmem:[%s1012 + $0xc] sm:$0xf]
        %v1159 = vld [vmem:[%s1015] sm:$0x1]
        %v1161 = vperm.slane %v1159, 0
        %v1167 = vunpack.c.l.b16 %v1155
        %v1168 = vunpack.c.l.b16 %v1156
        %v1169 = vunpack.c.l.b16 %v1157
        %v1170 = vunpack.c.l.b16 %v1158
        %v1171 = vpack.c.b16 %v1168, %v1167
        %v1172 = vpack.c.b16 %v1170, %v1169
        %1175 = vmatpush.bf16.msra.mxu0 0
        %1176 = vmatpush.bf16.msra.mxu0 0
        %1177 = vmatpush.bf16.msra.mxu0 0
        %1178 = vmatpush.bf16.msra.mxu0 0
        %1179 = vmatpush.bf16.msra.mxu0 0
        %1180 = vmatpush.bf16.msra.mxu0 0
        %1181 = vmatpush.bf16.msra.mxu0 %v1172
        %1182 = vmatpush.bf16.msra.mxu0 %v1171
        %1183 = vmatmul.bf16.gmra.mxu0 %v1138
        %v1184 = vpop.f32.mrf.mxu0
        %v1185 = vadd.f32 %v1161, %v1184
        %v1186 = vpop.f32.mrf.mxu0
        %1187 = vdwg.mxu0
        %v1188 = vpack.c.bf16 %v1185, %v1185
        %v1189 = vld [vmem:[%s1020] sm:$0xf]
        %v1190 = vld [vmem:[%s1020 + $0x4] sm:$0xf]
        %v1191 = vld [vmem:[%s1020 + $0x8] sm:$0xf]
        %v1192 = vld [vmem:[%s1020 + $0xc] sm:$0xf]
        %v1193 = vld [vmem:[%s1023] sm:$0x1]
        %v1195 = vperm.slane %v1193, 0
        %v1201 = vunpack.c.l.b16 %v1189
        %v1202 = vunpack.c.l.b16 %v1190
        %v1203 = vunpack.c.l.b16 %v1191
        %v1204 = vunpack.c.l.b16 %v1192
        %v1205 = vpack.c.b16 %v1202, %v1201
        %v1206 = vpack.c.b16 %v1204, %v1203
        %1209 = vmatpush.bf16.msra.mxu0 0
        %1210 = vmatpush.bf16.msra.mxu0 0
        %1211 = vmatpush.bf16.msra.mxu0 0
        %1212 = vmatpush.bf16.msra.mxu0 0
        %1213 = vmatpush.bf16.msra.mxu0 0
        %1214 = vmatpush.bf16.msra.mxu0 0
        %1215 = vmatpush.bf16.msra.mxu0 %v1206
        %1216 = vmatpush.bf16.msra.mxu0 %v1205
        %1217 = vmatmul.bf16.gmra.mxu0 %v1138
        %v1218 = vpop.f32.mrf.mxu0
        %v1219 = vadd.f32 %v1195, %v1218
        %v1220 = vpop.f32.mrf.mxu0
        %1221 = vdwg.mxu0
        %v1222 = vpack.c.bf16 %v1219, %v1219
        %vm1223 = vcmask 64512
        %v1225 = vsel %vm1223, %v1154, 0
        %v1228 = vsel %vm1223, %v1188, 0
        %1230 = vmatpush.bf16.xpose.msra.mxu0 0
        %1231 = vmatpush.bf16.xpose.msra.mxu0 0
        %1232 = vmatpush.bf16.xpose.msra.mxu0 0
        %1233 = vmatpush.bf16.xpose.msra.mxu0 0
        %1234 = vmatpush.bf16.xpose.msra.mxu0 0
        %1235 = vmatpush.bf16.xpose.msra.mxu0 0
        %1236 = vmatpush.bf16.xpose.msra.mxu0 0
        %1237 = vmatpush.bf16.xpose.msra.mxu0 %v1228
        %1238 = vmatmul.bf16.gmra.mxu0 %v1225
        %v1239 = vpop.f32.mrf.mxu0
        %v1240 = vadd.f32 %v1075, %v1239
        %v1241 = vpop.f32.mrf.mxu0
        %1242 = vdwg.mxu0
        %v1243 = vsel %vm1223, %v1240, -inf
        %1244 = vmax.xlane.f32.xlu0 %v1243
        %v1245 = vpop.xlane.xlu0 %1244
        %v1246 = vsub.f32 %v1240, %v1245
        %v1247 = vmul.f32 %v1246, 1.442695
        %v1248 = vpow.pop %v1247
        %v1249 = vsel %vm1223, %v1248, 0.0
        %1250 = vadd.xlane.f32.xlu0 %v1249
        %v1251 = vpop.xlane.xlu0 %1250
        %v1252 = vrcp.pop %v1251
        %v1253 = vmul.f32 %v1251, %v1252
        %v1254 = vsub.f32 1.0, %v1253
        %v1255 = vmul.f32 %v1252, %v1254
        %v1256 = vadd.f32 %v1252, %v1255
        %vm1257 = vweird.f32 %v1251
        %vm1258 = vweird.f32 %v1252
        %vm1259 = vmor %vm1257, %vm1258
        %v1260 = vsel %vm1259, %v1252, %v1256
        %v1261 = vand.u32 2147483647, %v1251
        %vm1262 = vcmp.eq.f32.partialorder %v1261, 8.507059e+37
        %v1263 = vand.u32 %v1251, 2147483648
        %v1264 = vor.u32 1.1754944e-38, %v1263
        %v1265 = vsel %vm1262, %v1264, %v1260
        %v1266 = vmul.f32 %v1248, %v1265
        %v1267 = vpack.c.bf16 %v1266, %v1266
        %v1269 = vsel %vm1223, %v1267, 0
        %vm1271 = vcmask 1043456
        %v1273 = vsel %vm1271, %v1222, 0
        %1275 = vmatpush.bf16.msra.mxu0 0
        %1276 = vmatpush.bf16.msra.mxu0 0
        %1277 = vmatpush.bf16.msra.mxu0 0
        %1278 = vmatpush.bf16.msra.mxu0 0
        %1279 = vmatpush.bf16.msra.mxu0 0
        %1280 = vmatpush.bf16.msra.mxu0 0
        %1281 = vmatpush.bf16.msra.mxu0 0
        %1282 = vmatpush.bf16.msra.mxu0 %v1273
        %1283 = vmatmul.bf16.gmra.mxu0 %v1269
        %v1284 = vpop.f32.mrf.mxu0
        %v1285 = vadd.f32 0.0, %v1284
        %v1286 = vpop.f32.mrf.mxu0
        %1287 = vdwg.mxu0
        %v1288 = vpack.c.bf16 %v1285, %v1285
        %v1290 = vunpack.c.l.b16 %v1154
        %v1291 = vpack.c.b16 %v1290, %v1290
        %1292 = vrot.lane.b32.xlu0 %v1291, 120
        %v1293 = vpop.permute.xlu0 %1292
        %v1295 = vunpack.c.l.b16 %v1188
        %v1296 = vpack.c.b16 %v1295, %v1295
        %1297 = vrot.lane.b32.xlu0 %v1296, 120
        %v1298 = vpop.permute.xlu0 %1297
        %v1300 = vsel %vm1223, %v1293, 0
        %v1303 = vsel %vm1223, %v1298, 0
        %1305 = vmatpush.bf16.xpose.msra.mxu0 0
        %1306 = vmatpush.bf16.xpose.msra.mxu0 0
        %1307 = vmatpush.bf16.xpose.msra.mxu0 0
        %1308 = vmatpush.bf16.xpose.msra.mxu0 0
        %1309 = vmatpush.bf16.xpose.msra.mxu0 0
        %1310 = vmatpush.bf16.xpose.msra.mxu0 0
        %1311 = vmatpush.bf16.xpose.msra.mxu0 0
        %1312 = vmatpush.bf16.xpose.msra.mxu0 %v1303
        %1313 = vmatmul.bf16.gmra.mxu0 %v1300
        %v1314 = vpop.f32.mrf.mxu0
        %v1315 = vadd.f32 %v1075, %v1314
        %v1316 = vpop.f32.mrf.mxu0
        %1317 = vdwg.mxu0
        %v1318 = vsel %vm1223, %v1315, -inf
        %1319 = vmax.xlane.f32.xlu0 %v1318
        %v1320 = vpop.xlane.xlu0 %1319
        %v1321 = vsub.f32 %v1315, %v1320
        %v1322 = vmul.f32 %v1321, 1.442695
        %v1323 = vpow.pop %v1322
        %v1324 = vsel %vm1223, %v1323, 0.0
        %1325 = vadd.xlane.f32.xlu0 %v1324
        %v1326 = vpop.xlane.xlu0 %1325
        %v1327 = vrcp.pop %v1326
        %v1328 = vmul.f32 %v1326, %v1327
        %v1329 = vsub.f32 1.0, %v1328
        %v1330 = vmul.f32 %v1327, %v1329
        %v1331 = vadd.f32 %v1327, %v1330
        %vm1332 = vweird.f32 %v1326
        %vm1333 = vweird.f32 %v1327
        %vm1334 = vmor %vm1332, %vm1333
        %v1335 = vsel %vm1334, %v1327, %v1331
        %v1336 = vand.u32 2147483647, %v1326
        %vm1337 = vcmp.eq.f32.partialorder %v1336, 8.507059e+37
        %v1338 = vand.u32 %v1326, 2147483648
        %v1339 = vor.u32 1.1754944e-38, %v1338
        %v1340 = vsel %vm1337, %v1339, %v1335
        %v1341 = vmul.f32 %v1323, %v1340
        %v1342 = vpack.c.bf16 %v1341, %v1341
        %v1344 = vunpack.c.l.b16 %v1222
        %v1345 = vpack.c.b16 %v1344, %v1344
        %1346 = vrot.lane.b32.xlu0 %v1345, 120
        %v1347 = vpop.permute.xlu0 %1346
        %v1349 = vsel %vm1223, %v1342, 0
        %v1352 = vsel %vm1271, %v1347, 0
        %1354 = vmatpush.bf16.msra.mxu0 0
        %1355 = vmatpush.bf16.msra.mxu0 0
        %1356 = vmatpush.bf16.msra.mxu0 0
        %1357 = vmatpush.bf16.msra.mxu0 0
        %1358 = vmatpush.bf16.msra.mxu0 0
        %1359 = vmatpush.bf16.msra.mxu0 0
        %1360 = vmatpush.bf16.msra.mxu0 0
        %1361 = vmatpush.bf16.msra.mxu0 %v1352
        %1362 = vmatmul.bf16.gmra.mxu0 %v1349
        %v1363 = vpop.f32.mrf.mxu0
        %v1364 = vadd.f32 0.0, %v1363
        %v1365 = vpop.f32.mrf.mxu0
        %1366 = vdwg.mxu0
        %v1367 = vpack.c.bf16 %v1364, %v1364
        %1368 = vrot.lane.b32.xlu0 %v1291, 112
        %v1369 = vpop.permute.xlu0 %1368
        %1370 = vrot.lane.b32.xlu0 %v1296, 112
        %v1371 = vpop.permute.xlu0 %1370
        %v1373 = vsel %vm1223, %v1369, 0
        %v1376 = vsel %vm1223, %v1371, 0
        %1378 = vmatpush.bf16.xpose.msra.mxu0 0
        %1379 = vmatpush.bf16.xpose.msra.mxu0 0
        %1380 = vmatpush.bf16.xpose.msra.mxu0 0
        %1381 = vmatpush.bf16.xpose.msra.mxu0 0
        %1382 = vmatpush.bf16.xpose.msra.mxu0 0
        %1383 = vmatpush.bf16.xpose.msra.mxu0 0
        %1384 = vmatpush.bf16.xpose.msra.mxu0 0
        %1385 = vmatpush.bf16.xpose.msra.mxu0 %v1376
        %1386 = vmatmul.bf16.gmra.mxu0 %v1373
        %v1387 = vpop.f32.mrf.mxu0
        %v1388 = vadd.f32 %v1075, %v1387
        %v1389 = vpop.f32.mrf.mxu0
        %1390 = vdwg.mxu0
        %v1391 = vsel %vm1223, %v1388, -inf
        %1392 = vmax.xlane.f32.xlu0 %v1391
        %v1393 = vpop.xlane.xlu0 %1392
        %v1394 = vsub.f32 %v1388, %v1393
        %v1395 = vmul.f32 %v1394, 1.442695
        %v1396 = vpow.pop %v1395
        %v1397 = vsel %vm1223, %v1396, 0.0
        %1398 = vadd.xlane.f32.xlu0 %v1397
        %v1399 = vpop.xlane.xlu0 %1398
        %v1400 = vrcp.pop %v1399
        %v1401 = vmul.f32 %v1399, %v1400
        %v1402 = vsub.f32 1.0, %v1401
        %v1403 = vmul.f32 %v1400, %v1402
        %v1404 = vadd.f32 %v1400, %v1403
        %vm1405 = vweird.f32 %v1399
        %vm1406 = vweird.f32 %v1400
        %vm1407 = vmor %vm1405, %vm1406
        %v1408 = vsel %vm1407, %v1400, %v1404
        %v1409 = vand.u32 2147483647, %v1399
        %vm1410 = vcmp.eq.f32.partialorder %v1409, 8.507059e+37
        %v1411 = vand.u32 %v1399, 2147483648
        %v1412 = vor.u32 1.1754944e-38, %v1411
        %v1413 = vsel %vm1410, %v1412, %v1408
        %v1414 = vmul.f32 %v1396, %v1413
        %v1415 = vpack.c.bf16 %v1414, %v1414
        %1416 = vrot.lane.b32.xlu0 %v1345, 112
        %v1417 = vpop.permute.xlu0 %1416
        %v1419 = vsel %vm1223, %v1415, 0
        %v1422 = vsel %vm1271, %v1417, 0
        %1424 = vmatpush.bf16.msra.mxu0 0
        %1425 = vmatpush.bf16.msra.mxu0 0
        %1426 = vmatpush.bf16.msra.mxu0 0
        %1427 = vmatpush.bf16.msra.mxu0 0
        %1428 = vmatpush.bf16.msra.mxu0 0
        %1429 = vmatpush.bf16.msra.mxu0 0
        %1430 = vmatpush.bf16.msra.mxu0 0
        %1431 = vmatpush.bf16.msra.mxu0 %v1422
        %1432 = vmatmul.bf16.gmra.mxu0 %v1419
        %v1433 = vpop.f32.mrf.mxu0
        %v1434 = vadd.f32 0.0, %v1433
        %v1435 = vpop.f32.mrf.mxu0
        %1436 = vdwg.mxu0
        %v1437 = vpack.c.bf16 %v1434, %v1434
        %1438 = vrot.lane.b32.xlu0 %v1291, 104
        %v1439 = vpop.permute.xlu0 %1438
        %1440 = vrot.lane.b32.xlu0 %v1296, 104
        %v1441 = vpop.permute.xlu0 %1440
        %v1443 = vsel %vm1223, %v1439, 0
        %v1446 = vsel %vm1223, %v1441, 0
        %1448 = vmatpush.bf16.xpose.msra.mxu0 0
        %1449 = vmatpush.bf16.xpose.msra.mxu0 0
        %1450 = vmatpush.bf16.xpose.msra.mxu0 0
        %1451 = vmatpush.bf16.xpose.msra.mxu0 0
        %1452 = vmatpush.bf16.xpose.msra.mxu0 0
        %1453 = vmatpush.bf16.xpose.msra.mxu0 0
        %1454 = vmatpush.bf16.xpose.msra.mxu0 0
        %1455 = vmatpush.bf16.xpose.msra.mxu0 %v1446
        %1456 = vmatmul.bf16.gmra.mxu0 %v1443
        %v1457 = vpop.f32.mrf.mxu0
        %v1458 = vadd.f32 %v1075, %v1457
        %v1459 = vpop.f32.mrf.mxu0
        %1460 = vdwg.mxu0
        %v1461 = vsel %vm1223, %v1458, -inf
        %1462 = vmax.xlane.f32.xlu0 %v1461
        %v1463 = vpop.xlane.xlu0 %1462
        %v1464 = vsub.f32 %v1458, %v1463
        %v1465 = vmul.f32 %v1464, 1.442695
        %v1466 = vpow.pop %v1465
        %v1467 = vsel %vm1223, %v1466, 0.0
        %1468 = vadd.xlane.f32.xlu0 %v1467
        %v1469 = vpop.xlane.xlu0 %1468
        %v1470 = vrcp.pop %v1469
        %v1471 = vmul.f32 %v1469, %v1470
        %v1472 = vsub.f32 1.0, %v1471
        %v1473 = vmul.f32 %v1470, %v1472
        %v1474 = vadd.f32 %v1470, %v1473
        %vm1475 = vweird.f32 %v1469
        %vm1476 = vweird.f32 %v1470
        %vm1477 = vmor %vm1475, %vm1476
        %v1478 = vsel %vm1477, %v1470, %v1474
        %v1479 = vand.u32 2147483647, %v1469
        %vm1480 = vcmp.eq.f32.partialorder %v1479, 8.507059e+37
        %v1481 = vand.u32 %v1469, 2147483648
        %v1482 = vor.u32 1.1754944e-38, %v1481
        %v1483 = vsel %vm1480, %v1482, %v1478
        %v1484 = vmul.f32 %v1466, %v1483
        %v1485 = vpack.c.bf16 %v1484, %v1484
        %1486 = vrot.lane.b32.xlu0 %v1345, 104
        %v1487 = vpop.permute.xlu0 %1486
        %v1489 = vsel %vm1223, %v1485, 0
        %v1492 = vsel %vm1271, %v1487, 0
        %1494 = vmatpush.bf16.msra.mxu0 0
        %1495 = vmatpush.bf16.msra.mxu0 0
        %1496 = vmatpush.bf16.msra.mxu0 0
        %1497 = vmatpush.bf16.msra.mxu0 0
        %1498 = vmatpush.bf16.msra.mxu0 0
        %1499 = vmatpush.bf16.msra.mxu0 0
        %1500 = vmatpush.bf16.msra.mxu0 0
        %1501 = vmatpush.bf16.msra.mxu0 %v1492
        %1502 = vmatmul.bf16.gmra.mxu0 %v1489
        %v1503 = vpop.f32.mrf.mxu0
        %v1504 = vadd.f32 0.0, %v1503
        %v1505 = vpop.f32.mrf.mxu0
        %1506 = vdwg.mxu0
        %v1507 = vpack.c.bf16 %v1504, %v1504
        %v1509 = vunpack.c.l.b16 %v1367
        %v1510 = vpack.c.b16 %v1509, %v1509
        %1511 = vrot.lane.b32.xlu0 %v1510, 8
        %v1512 = vpop.permute.xlu0 %1511
        %v1514 = vunpack.c.l.b16 %v1437
        %v1515 = vpack.c.b16 %v1514, %v1514
        %1516 = vrot.lane.b32.xlu0 %v1515, 16
        %v1517 = vpop.permute.xlu0 %1516
        %v1519 = vunpack.c.l.b16 %v1507
        %v1520 = vpack.c.b16 %v1519, %v1519
        %1521 = vrot.lane.b32.xlu0 %v1520, 24
        %v1522 = vpop.permute.xlu0 %1521
        %v1525 = vsel %vm1223, %v1288, %v1512
        %vm1526 = vcmask 130048
        %v1528 = vsel %vm1526, %v1525, %v1517
        %vm1529 = vcmask 195584
        %v1531 = vsel %vm1529, %v1528, %v1522
        %v1532 = vld [vmem:[%s1028] sm:$0xf]
        %v1533 = vld [vmem:[%s1028 + $0x4] sm:$0xf]
        %v1534 = vld [vmem:[%s1028 + $0x8] sm:$0xf]
        %v1535 = vld [vmem:[%s1028 + $0xc] sm:$0xf]
        %v1540 = vunpack.c.l.b16 %v1532
        %v1541 = vunpack.c.l.b16 %v1533
        %v1542 = vunpack.c.l.b16 %v1534
        %v1543 = vunpack.c.l.b16 %v1535
        %v1544 = vpack.c.b16 %v1541, %v1540
        %v1545 = vpack.c.b16 %v1543, %v1542
        %v1548 = vsel %vm1078, %v1531, 0
        %1550 = vmatpush.bf16.msra.mxu0 0
        %1551 = vmatpush.bf16.msra.mxu0 0
        %1552 = vmatpush.bf16.msra.mxu0 0
        %1553 = vmatpush.bf16.msra.mxu0 0
        %1554 = vmatpush.bf16.msra.mxu0 0
        %1555 = vmatpush.bf16.msra.mxu0 0
        %1556 = vmatpush.bf16.msra.mxu0 %v1545
        %1557 = vmatpush.bf16.msra.mxu0 %v1544
        %1558 = vmatmul.bf16.gmra.mxu0 %v1548
        %v1559 = vpop.f32.mrf.mxu0
        %v1560 = vadd.f32 0.0, %v1559
        %v1561 = vpop.f32.mrf.mxu0
        %1562 = vdwg.mxu0
        %v1563 = vadd.f32 %v1074, %v1560
        %v1564 = vld [vmem:[%s1031] sm:$0x1]
        %v1566 = vperm.slane %v1564, 0
        %v1568 = vadd.f32 %v1563, %v1566
        %v1569 = vld [vmem:[%s1034] sm:$0x1]
        %v1570 = vld [vmem:[%s868] sm:$0x1]
        %v1571 = vsel %vm1078, %v1568, 0.0
        %1572 = vadd.xlane.f32.xlu0 %v1571
        %v1573 = vpop.xlane.xlu0 %1572
        %v1574 = vmul.f32 %v1573, %v1088
        %v1575 = vsub.f32 %v1568, %v1574
        %v1576 = vmul.f32 %v1575, %v1575
        %v1577 = vsel %vm1078, %v1576, 0.0
        %1578 = vadd.xlane.f32.xlu0 %v1577
        %v1579 = vpop.xlane.xlu0 %1578
        %v1580 = vmul.f32 %v1579, %v1088
        %v1581 = vadd.f32 %v1580, 1e-05
        %v1582 = vrsqrt.pop %v1581
        %v1583 = vmul.f32 %v1582, %v1581
        %v1584 = vmul.f32 %v1583, %v1582
        %v1585 = vmul.f32 0.5, %v1584
        %v1586 = vsub.f32 1.5, %v1585
        %v1587 = vmul.f32 %v1582, %v1586
        %vm1588 = vweird.f32 %v1581
        %vm1589 = vweird.f32 %v1582
        %vm1590 = vmor %vm1588, %vm1589
        %v1591 = vsel %vm1590, %v1582, %v1587
        %v1592 = vmul.f32 %v1575, %v1591
        %v1594 = vperm.slane %v1569, 0
        %v1596 = vmul.f32 %v1592, %v1594
        %v1598 = vperm.slane %v1570, 0
        %v1600 = vadd.f32 %v1596, %v1598
        %v1601 = vpack.c.bf16 %v1600, %v1600
        %v1602 = vld [vmem:[%s1039] sm:$0xf]
        %v1603 = vld [vmem:[%s1039 + $0x4] sm:$0xf]
        %v1604 = vld [vmem:[%s1039 + $0x8] sm:$0xf]
        %v1605 = vld [vmem:[%s1039 + $0xc] sm:$0xf]
        %v1606 = vld [vmem:[%s1042] sm:$0x1]
        %v1608 = vperm.slane %v1606, 0
        %v1614 = vunpack.c.l.b16 %v1602
        %v1615 = vunpack.c.l.b16 %v1603
        %v1616 = vunpack.c.l.b16 %v1604
        %v1617 = vunpack.c.l.b16 %v1605
        %v1618 = vpack.c.b16 %v1615, %v1614
        %v1619 = vpack.c.b16 %v1617, %v1616
        %v1623 = vsel %vm1078, %v1601, 0
        %1625 = vmatpush.bf16.msra.mxu0 0
        %1626 = vmatpush.bf16.msra.mxu0 0
        %1627 = vmatpush.bf16.msra.mxu0 0
        %1628 = vmatpush.bf16.msra.mxu0 0
        %1629 = vmatpush.bf16.msra.mxu0 0
        %1630 = vmatpush.bf16.msra.mxu0 0
        %1631 = vmatpush.bf16.msra.mxu0 %v1619
        %1632 = vmatpush.bf16.msra.mxu0 %v1618
        %1633 = vmatmul.bf16.gmra.mxu0 %v1623
        %v1634 = vpop.f32.mrf.mxu0
        %v1635 = vadd.f32 %v1608, %v1634
        %v1636 = vpop.f32.mrf.mxu0
        %1637 = vdwg.mxu0
        %v1638 = vmul.f32 %v1635, 0.5
        %v1639 = vmul.f32 %v1635, 0.044715
        %v1640 = vmul.f32 %v1639, %v1635
        %v1641 = vmul.f32 %v1640, %v1635
        %v1642 = vadd.f32 %v1635, %v1641
        %v1643 = vmul.f32 %v1642, 0.7978846
        %v1644 = vtanh.pop %v1643
        %v1645 = vadd.f32 %v1644, 1.0
        %v1646 = vmul.f32 %v1638, %v1645
        %v1647 = vpack.c.bf16 %v1646, %v1646
        %v1648 = vld [vmem:[%s1047] sm:$0xf]
        %v1649 = vld [vmem:[%s1047 + $0x4] sm:$0xf]
        %v1650 = vld [vmem:[%s1047 + $0x8] sm:$0xf]
        %v1651 = vld [vmem:[%s1047 + $0xc] sm:$0xf]
        %v1652 = vld [vmem:[%s1047 + $0x10] sm:$0xf]
        %v1653 = vld [vmem:[%s1047 + $0x14] sm:$0xf]
        %v1654 = vld [vmem:[%s1047 + $0x18] sm:$0xf]
        %v1655 = vld [vmem:[%s1047 + $0x1c] sm:$0xf]
        %v1656 = vld [vmem:[%s1047 + $0x20] sm:$0xf]
        %v1657 = vld [vmem:[%s1047 + $0x24] sm:$0xf]
        %v1658 = vld [vmem:[%s1047 + $0x28] sm:$0xf]
        %v1659 = vld [vmem:[%s1047 + $0x2c] sm:$0xf]
        %v1660 = vld [vmem:[%s1047 + $0x30] sm:$0xf]
        %v1661 = vld [vmem:[%s1047 + $0x34] sm:$0xf]
        %v1662 = vld [vmem:[%s1047 + $0x38] sm:$0xf]
        %v1663 = vld [vmem:[%s1047 + $0x3c] sm:$0xf]
        %v1680 = vunpack.c.l.b16 %v1648
        %v1681 = vunpack.c.l.b16 %v1649
        %v1682 = vunpack.c.l.b16 %v1650
        %v1683 = vunpack.c.l.b16 %v1651
        %v1684 = vunpack.c.l.b16 %v1652
        %v1685 = vunpack.c.l.b16 %v1653
        %v1686 = vunpack.c.l.b16 %v1654
        %v1687 = vunpack.c.l.b16 %v1655
        %v1688 = vunpack.c.l.b16 %v1656
        %v1689 = vunpack.c.l.b16 %v1657
        %v1690 = vunpack.c.l.b16 %v1658
        %v1691 = vunpack.c.l.b16 %v1659
        %v1692 = vunpack.c.l.b16 %v1660
        %v1693 = vunpack.c.l.b16 %v1661
        %v1694 = vunpack.c.l.b16 %v1662
        %v1695 = vunpack.c.l.b16 %v1663
        %v1696 = vpack.c.b16 %v1681, %v1680
        %v1697 = vpack.c.b16 %v1683, %v1682
        %v1698 = vpack.c.b16 %v1685, %v1684
        %v1699 = vpack.c.b16 %v1687, %v1686
        %v1700 = vpack.c.b16 %v1689, %v1688
        %v1701 = vpack.c.b16 %v1691, %v1690
        %v1702 = vpack.c.b16 %v1693, %v1692
        %v1703 = vpack.c.b16 %v1695, %v1694
        %1712 = vmatpush.bf16.msra.mxu0 %v1703
        %1713 = vmatpush.bf16.msra.mxu0 %v1702
        %1714 = vmatpush.bf16.msra.mxu0 %v1701
        %1715 = vmatpush.bf16.msra.mxu0 %v1700
        %1716 = vmatpush.bf16.msra.mxu0 %v1699
        %1717 = vmatpush.bf16.msra.mxu0 %v1698
        %1718 = vmatpush.bf16.msra.mxu0 %v1697
        %1719 = vmatpush.bf16.msra.mxu0 %v1696
        %1720 = vmatmul.bf16.gmra.mxu0 %v1647
        %v1721 = vpop.f32.mrf.mxu0
        %v1722 = vadd.f32 0.0, %v1721
        %v1723 = vpop.f32.mrf.mxu0
        %1724 = vdwg.mxu0
        %v1725 = vadd.f32 %v1568, %v1722
        %v1726 = vld [vmem:[%s1050] sm:$0x1]
        %v1728 = vperm.slane %v1726, 0
        %v1730 = vadd.f32 %v1725, %v1728
        %p1731 = scmp.lt.s32.totalorder %s53, 1
        // Predicated region
        $region125: #{tpu_custom_call.1} parent=99 // pred_check
          %p1732 = pneg %p1731
        $region126: #{tpu_custom_call.1} parent=99 // pred_check_branch
          %1734 = sbr.rel (%p1732) target = $region128
        $region127: #{tpu_custom_call.1} parent=99 // pred_region
          %1735 = vst.msk [vmem:[#allocation2] sm:$0xff] %vm1078, %v1730
          %v1736 = vpack.c.bf16 %v1730, %v1730
          %vm1737 = vcmask 257024
          %1738 = vst.msk [vmem:[%s992] sm:$0xf] %vm1737, %v1736
        $region128: #{tpu_custom_call.1} parent=99 // pred_fallthru
          _
        %p1739 = scmp.eq.s32.totalorder %s53, 1
        // Predicated region
        $region129: #{tpu_custom_call.1} parent=99 // pred_check
          %p1740 = pneg %p1739
        $region130: #{tpu_custom_call.1} parent=99 // pred_check_branch
          %1742 = sbr.rel (%p1740) target = $region132
        $region131: #{tpu_custom_call.1} parent=99 // pred_region
          %v1743 = vld [vmem:[%s18] sm:$0x1]
          %v1744 = vld [vmem:[%s19] sm:$0x1]
          %v1745 = vsel %vm1078, %v1730, 0.0
          %1746 = vadd.xlane.f32.xlu0 %v1745
          %v1747 = vpop.xlane.xlu0 %1746
          %v1748 = vmul.f32 %v1747, %v1088
          %v1749 = vsub.f32 %v1730, %v1748
          %v1750 = vmul.f32 %v1749, %v1749
          %v1751 = vsel %vm1078, %v1750, 0.0
          %1752 = vadd.xlane.f32.xlu0 %v1751
          %v1753 = vpop.xlane.xlu0 %1752
          %v1754 = vmul.f32 %v1753, %v1088
          %v1755 = vadd.f32 %v1754, 1e-05
          %v1756 = vrsqrt.pop %v1755
          %v1757 = vmul.f32 %v1756, %v1755
          %v1758 = vmul.f32 %v1757, %v1756
          %v1759 = vmul.f32 0.5, %v1758
          %v1760 = vsub.f32 1.5, %v1759
          %v1761 = vmul.f32 %v1756, %v1760
          %vm1762 = vweird.f32 %v1755
          %vm1763 = vweird.f32 %v1756
          %vm1764 = vmor %vm1762, %vm1763
          %v1765 = vsel %vm1764, %v1756, %v1761
          %v1766 = vmul.f32 %v1749, %v1765
          %v1768 = vperm.slane %v1743, 0
          %v1770 = vmul.f32 %v1766, %v1768
          %v1772 = vperm.slane %v1744, 0
          %v1774 = vadd.f32 %v1770, %v1772
          %v1775 = vpack.c.bf16 %v1774, %v1774
          %vm1776 = vcmask 257024
          %1777 = vst.msk [vmem:[%s992] sm:$0xf] %vm1776, %v1775
          %v1778 = vld [vmem:[%s841] sm:$0x1]
          %v1779 = vperm.slane %v1778, 0
          %v1780 = vlaneseq
          %v1781 = vshrl.u32 %v1780, 7
          %1783 = vset.pattern.permute.xlu0 %v1781
          %1784 = vperm.xlu0 %1783, %v1779
          %v1785 = vpop.permute.xlu0 %1784
          %v1786 = vmul.f32 %v1774, %v1785
          %1787 = vst.msk [vmem:[%s999] sm:$0xff] %vm1078, %v1786
        $region132: #{tpu_custom_call.1} parent=99 // pred_fallthru
          _
        %s1788 = sand.u32 %s580, 1
        %s1789 = scalar_lea.sflag [#allocation6], %s1788
        %s1790 = sand.u32 %s580, 1
        %s1791 = smul.addr %s1790, 4
        %s1792 = scalar_lea.vmem [#allocation13], %s1791
        %s1793 = sand.u32 %s606, 1
        %s1794 = scalar_lea.sflag [#allocation15], %s1793
        %s1795 = sand.u32 %s606, 1
        %s1796 = smul.addr %s1795, 8
        %s1797 = scalar_lea.vmem [#allocation14], %s1796
        // Predicated region
        $region133: #{tpu_custom_call.1} parent=99 // pred_check
          %p1798 = pneg %p590
        $region134: #{tpu_custom_call.1} parent=99 // pred_check_branch
          %1800 = sbr.rel (%p1798) target = $region136
        $region135: #{tpu_custom_call.1} parent=99 // pred_region
          %1802 = vsyncadd %s1789, 0
          %s1803 = smul.addr %s53, 2
          %s1804 = sadd.s32 %s52, %s1803
          %s1805 = smul.addr %s1804, 4
          %s1806 = scalar_lea.hbm %s20, %s1805
          %s1808 = sshll.u32 %s1792, 4
          %s1809 = int_to_ptr.vmem [resolvable:$true] %s1808
          %s1810 = sshll.u32 %s1806, 4
          %s1811 = int_to_ptr.hbm [resolvable:$true] %s1810
          %1813 = dma.vmem_to_hbm [thread:$0]  %s1809, 64, %s1811, %s1789
        $region136: #{tpu_custom_call.1} parent=99 // pred_fallthru
          _
        // Predicated region
        $region137: #{tpu_custom_call.1} parent=99 // pred_check
          %p1814 = pneg %p616
        $region138: #{tpu_custom_call.1} parent=99 // pred_check_branch
          %1816 = sbr.rel (%p1814) target = $region140
        $region139: #{tpu_custom_call.1} parent=99 // pred_region
          %1818 = vsyncadd %s1794, 0
          %s1819 = smul.addr %s52, 8
          %s1820 = scalar_lea.hbm %s21, %s1819
          %s1822 = sshll.u32 %s1797, 4
          %s1823 = int_to_ptr.vmem [resolvable:$true] %s1822
          %s1824 = sshll.u32 %s1820, 4
          %s1825 = int_to_ptr.hbm [resolvable:$true] %s1824
          %1827 = dma.vmem_to_hbm [thread:$0]  %s1823, 128, %s1825, %s1794
        $region140: #{tpu_custom_call.1} parent=99 // pred_fallthru
          _
      $region100: #{tpu_custom_call.1} parent=5 // pred_fallthru
        _
      %p1828 = scmp.le.s32.totalorder 2, %s43
      // Predicated region
      $region141: #{tpu_custom_call.1} parent=5 // pred_check
        %p1829 = pneg %p1828
      $region142: #{tpu_custom_call.1} parent=5 // pred_check_branch
        %1831 = sbr.rel (%p1829) target = $region144
      $region143: #{tpu_custom_call.1} parent=5 // pred_region
        %s1832 = ssub.s32 %s43, 2
        // Predicated region
        $region145: #{tpu_custom_call.1} parent=143 // pred_check
          %p1833 = pneg %p596
        $region146: #{tpu_custom_call.1} parent=143 // pred_check_branch
          %1835 = sbr.rel (%p1833) target = $region148
        $region147: #{tpu_custom_call.1} parent=143 // pred_region
          %s1836 = sand.u32 %s581, 1
          %s1837 = scalar_lea.sflag [#allocation6], %s1836
          %s1838 = sand.u32 %s581, 1
          %s1839 = smul.addr %s1838, 4
          %s1840 = scalar_lea.vmem [#allocation13], %s1839
          %1842 = dma.done %s1837, 64
        $region148: #{tpu_custom_call.1} parent=143 // pred_fallthru
          _
        // Predicated region
        $region149: #{tpu_custom_call.1} parent=143 // pred_check
          %p1843 = pneg %p622
        $region150: #{tpu_custom_call.1} parent=143 // pred_check_branch
          %1845 = sbr.rel (%p1843) target = $region152
        $region151: #{tpu_custom_call.1} parent=143 // pred_region
          %s1846 = sand.u32 %s607, 1
          %s1847 = scalar_lea.sflag [#allocation15], %s1846
          %s1848 = sand.u32 %s607, 1
          %s1849 = smul.addr %s1848, 8
          %s1850 = scalar_lea.vmem [#allocation14], %s1849
          %1852 = dma.done %s1847, 128
        $region152: #{tpu_custom_call.1} parent=143 // pred_fallthru
          _
      $region144: #{tpu_custom_call.1} parent=5 // pred_fallthru
        _
    $region6: #{tpu_custom_call.1} parent=1 // loop_footer
      %s47 = sadd.s32 1, %s43
    $region7: #{tpu_custom_call.1} parent=1 // loop_footer_branch
      %42 = sbr.rel target = $region3
    $region8: #{tpu_custom_call.1} parent=1 // loop_exit
      _
    %1853 = vsyncpa [#allocation5], 1
    %s1854 = scalar_lea.sflag [#allocation5], 1
    %1855 = vsyncpa %s1854, 1
    %1856 = vsyncpa [#allocation8], 1
    %s1857 = scalar_lea.sflag [#allocation8], 1
    %1858 = vsyncpa %s1857, 1
    %1859 = vsyncpa [#allocation11], 1
    %s1860 = scalar_lea.sflag [#allocation11], 1
    %1861 = vsyncpa %s1860, 1
    %1862 = vsyncpa [#allocation6], 1
    %s1863 = scalar_lea.sflag [#allocation6], 1
    %1864 = vsyncpa %s1863, 1
    %1865 = vsyncpa [#allocation15], 1
    %s1866 = scalar_lea.sflag [#allocation15], 1
    %1867 = vsyncpa %s1866, 1

</llo_original>
